<compile_context>
chip_gen: v6e
topology: v6e:2x2x1
jax: 0.10.0
libtpu: 0.0.40
codegen_flags: <defaults>
</compile_context>

<pallas_src>
import math
from functools import partial

import jax
import jax.numpy as jnp
from jax.experimental import pallas as pl
from jax.experimental.pallas import tpu as pltpu


def _round_up(x, m):
    return ((x + m - 1) // m) * m


def _pad_last2(x, rows, cols):
    """Zero-pad the last two dims of x up to (rows, cols)."""
    pr, pc = rows - x.shape[-2], cols - x.shape[-1]
    if pr == 0 and pc == 0:
        return x
    cfg = [(0, 0)] * (x.ndim - 2) + [(0, pr), (0, pc)]
    return jnp.pad(x, cfg)


def _tpu_vmem_capacity_bytes():
    """Best-effort per-core VMEM capacity (v5e/v6e: 128 MiB, v7x: 64 MiB)."""
    try:
        return int(pltpu.get_tpu_info().vmem_capacity_bytes)
    except Exception:
        return 64 * 1024 * 1024  # conservative (v7x-sized) default


def _single_head_attention_kernel(seed_ref,
                                  q_ref, k_ref, v_ref,
                                  wq_ref, wk_ref, wv_ref,
                                  bq_ref, bk_ref, bv_ref,
                                  o_ref,
                                  kp_scr, vp_scr,
                                  *, scale, dropout_rate, s_valid, s_chunk):
    bt, lp, dp = q_ref.shape
    sp = k_ref.shape[1]
    n_chunks = sp // s_chunk  # static

    # ---- Q/K/V projections over flattened (BT*rows, D) so each MXU issue sees
    #      as many rows as possible.  Inputs & weights arrive bf16 from the
    #      wrapper; accumulate f32 on the MXU; bias adds in f32 (VPU).
    q2 = q_ref[...].reshape(bt * lp, dp)
    k2 = k_ref[...].reshape(bt * sp, dp)
    v2 = v_ref[...].reshape(bt * sp, dp)
    qp = jnp.dot(q2, wq_ref[...], preferred_element_type=jnp.float32) + bq_ref[...]
    kp = jnp.dot(k2, wk_ref[...], preferred_element_type=jnp.float32) + bk_ref[...]
    vp = jnp.dot(v2, wv_ref[...], preferred_element_type=jnp.float32) + bv_ref[...]

    # Fold 1/sqrt(D) into the (rows, D) query projection (cheaper than scaling
    # the (L, S) scores).  Stage K/V projections in bf16 VMEM scratch so the
    # KV-chunk loop can slice them with pl.ds (bounds softmax VMEM for long S).
    qp_b = (qp * scale).reshape(bt, lp, dp).astype(jnp.bfloat16)
    kp_scr[...] = kp.reshape(bt, sp, dp).astype(jnp.bfloat16)
    vp_scr[...] = vp.reshape(bt, sp, dp).astype(jnp.bfloat16)

    if dropout_rate > 0.0:
        # torch.dropout(attn, p, train=True): mask the (unnormalized) softmax
        # weights with a raw uint32 threshold compare (no int->float convert);
        # 1/(1-p) is folded into the final normalization below.
        pltpu.prng_seed(seed_ref[0] + pl.program_id(0))
        thresh = jnp.uint32(min(int(dropout_rate * 4294967296.0), 4294967295))

    def chunk_step(c, carry):
        m, l, acc = carry
        start = c * s_chunk
        if not isinstance(start, int):
            start = pl.multiple_of(start, s_chunk)
        kc = kp_scr[:, pl.ds(start, s_chunk), :]
        vc = vp_scr[:, pl.ds(start, s_chunk), :]

        # scores: contract the last dims directly (no .T -> no XLU transpose).
        s = jnp.einsum("bld,bsd->bls", qp_b, kc,
                       preferred_element_type=jnp.float32)
        if s_valid < sp:  # static: mask zero-padded key columns of this chunk
            col = jax.lax.broadcasted_iota(jnp.int32, s.shape, 2) + c * s_chunk
            s = jnp.where(col < s_valid, s, -1e30)

        # Flash-style online softmax; normalization deferred past PV matmul.
        m_new = jnp.maximum(m, jnp.max(s, axis=-1, keepdims=True))
        alpha = jnp.exp(m - m_new)
        e = jnp.exp(s - m_new)
        l_new = alpha * l + jnp.sum(e, axis=-1, keepdims=True)
        if dropout_rate > 0.0:
            bits = pltpu.bitcast(pltpu.prng_random_bits(e.shape), jnp.uint32)
            e = jnp.where(bits >= thresh, e, 0.0)
        acc_new = alpha * acc + jnp.einsum("bls,bsd->bld",
                                           e.astype(jnp.bfloat16), vc,
                                           preferred_element_type=jnp.float32)
        return m_new, l_new, acc_new

    init = (jnp.full((bt, lp, 1), -jnp.inf, jnp.float32),
            jnp.zeros((bt, lp, 1), jnp.float32),
            jnp.zeros((bt, lp, dp), jnp.float32))
    if n_chunks > 1:
        m, l, acc = jax.lax.fori_loop(0, n_chunks, chunk_step, init)
    else:
        m, l, acc = chunk_step(0, init)

    # EUP approximate reciprocal on the tiny (BT, L, 1) row sums (~free slot);
    # use approx=False if tighter parity with a pure-f32 reference is needed.
    inv = pl.reciprocal(l, approx=True)
    if dropout_rate > 0.0:
        inv = inv * (1.0 / (1.0 - dropout_rate))
    o_ref[...] = (acc * inv).astype(o_ref.dtype)


def single_head_attention(query, key, value, params, dropout_rate=0.0, seed=0):
    """query/key/value: (B, L/S, D). params: wq/wk/wv (D,D in->out == W_torch.T), bq/bk/bv (D,)."""
    B, L, D = query.shape
    S = key.shape[1]
    assert key.shape == (B, S, D) and value.shape == (B, S, D)

    scale = 1.0 / math.sqrt(D)
    out_dtype = query.dtype

    # Lane-dense feature dim (x128); seq dims rounded to 16 so bf16 operands
    # fill packed [16,128] vreg sublanes without relayout copies.  For aligned
    # production shapes every pad / final slice below is a no-op.
    Dp = _round_up(D, 128)
    Lp = _round_up(L, 16)
    Sp = _round_up(S, 16)

    # bf16 operands staged once in the wrapper (halves HBM->VMEM DMA bytes and
    # removes per-grid-step in-kernel casts); biases stay f32.
    qpad = _pad_last2(query, Lp, Dp).astype(jnp.bfloat16)
    kpad = _pad_last2(key, Sp, Dp).astype(jnp.bfloat16)
    vpad = _pad_last2(value, Sp, Dp).astype(jnp.bfloat16)
    wq = _pad_last2(params["wq"], Dp, Dp).astype(jnp.bfloat16)
    wk = _pad_last2(params["wk"], Dp, Dp).astype(jnp.bfloat16)
    wv = _pad_last2(params["wv"], Dp, Dp).astype(jnp.bfloat16)
    bq = _pad_last2(params["bq"].reshape(1, D).astype(jnp.float32), 1, Dp)
    bk = _pad_last2(params["bk"].reshape(1, D).astype(jnp.float32), 1, Dp)
    bv = _pad_last2(params["bv"].reshape(1, D).astype(jnp.float32), 1, Dp)

    # ---- generation-aware tiling --------------------------------------------
    vmem_cap = _tpu_vmem_capacity_bytes()
    vmem_limit = max(32 * 1024 * 1024,
                     int(min(vmem_cap * 3 // 4, 100 * 1024 * 1024)))
    # 64 MiB-per-core generation (v7x) has 2 TensorCores/chip: keep the
    # "parallel" batch grid length >= 2 so both cores get work.
    likely_two_core = vmem_cap <= 96 * 1024 * 1024
    row_target = 512 if vmem_cap >= 120 * 1024 * 1024 else 256

    # KV/softmax chunk bounds the (BT, Lp, s_chunk) scores/e/dropout-bits
    # intermediates (only matters for long S; single chunk otherwise).
    s_chunk = Sp
    if Sp > 1024:
        for c in (1024, 512, 256, 128, 64, 32, 16):
            if Sp % c == 0:
                s_chunk = c
                break

    def _step_vmem_bytes(bt):
        act = 2 * bt * (Lp * Dp * 2 + 2 * Sp * Dp * 2 + Lp * Dp * 4)  # dbl-buffered q/k/v + out tiles
        wgt = 3 * Dp * Dp * 2 + 3 * Dp * 4                            # single-buffered weights + biases
        scr = 2 * bt * Sp * Dp * 2                                    # kp/vp bf16 scratch
        tmp = bt * (Lp + 2 * Sp) * Dp * 4                             # f32 qp/kp/vp
        tmp += 2 * bt * Lp * s_chunk * 4                              # scores + e (one chunk)
        tmp += bt * Lp * Dp * (4 + 2)                                 # acc (f32) + qp_b (bf16)
        return act + wgt + scr + tmp

    max_bt = max(1, min(B, row_target // max(Lp, 1)))
    while max_bt > 1 and _step_vmem_bytes(max_bt) > vmem_limit * 9 // 10:
        max_bt -= 1
    if likely_two_core and B >= 2:
        max_bt = max(1, min(max_bt, B // 2))
    BT = 1
    for cand in range(max_bt, 0, -1):
        # TODO(synk): ragged (cdiv) grid + pl.when guard for prime/awkward B so
        # perf doesn't fall back to BT=1.
        if B % cand == 0:
            BT = cand
            break
    grid = (B // BT,)

    seed_arr = jnp.array([seed], dtype=jnp.int32)
    kernel = partial(_single_head_attention_kernel, scale=scale,
                     dropout_rate=float(dropout_rate), s_valid=S,
                     s_chunk=s_chunk)

    # Advisory cost estimate so XLA schedules the surrounding pads/slice well.
    flops = 2 * B * (Lp + 2 * Sp) * Dp * Dp + 4 * B * Lp * Sp * Dp
    cost = pl.CostEstimate(
        flops=flops,
        transcendentals=B * Lp * Sp,
        bytes_accessed=2 * (qpad.size + kpad.size + vpad.size
                            + wq.size + wk.size + wv.size)
                       + 4 * (bq.size + bk.size + bv.size + B * Lp * Dp))

    def _call(single_buffer_weights):
        # Grid-invariant weight/bias blocks: single-buffered (constant
        # index_map -> double-buffering only wastes VMEM).
        wb_kwargs = {"pipeline_mode": pl.Buffered(1)} if single_buffer_weights else {}
        q_spec = pl.BlockSpec((BT, Lp, Dp), lambda b, seed: (b, 0, 0))
        kv_spec = pl.BlockSpec((BT, Sp, Dp), lambda b, seed: (b, 0, 0))
        w_spec = pl.BlockSpec((Dp, Dp), lambda b, seed: (0, 0), **wb_kwargs)
        b_spec = pl.BlockSpec((1, Dp), lambda b, seed: (0, 0), **wb_kwargs)
        out = pl.pallas_call(
            kernel,
            out_shape=jax.ShapeDtypeStruct((B, Lp, Dp), out_dtype),
            grid_spec=pltpu.PrefetchScalarGridSpec(
                num_scalar_prefetch=1,
                grid=grid,
                in_specs=[q_spec, kv_spec, kv_spec,
                          w_spec, w_spec, w_spec,
                          b_spec, b_spec, b_spec],
                out_specs=pl.BlockSpec((BT, Lp, Dp), lambda b, seed: (b, 0, 0)),
                scratch_shapes=[pltpu.VMEM((BT, Sp, Dp), jnp.bfloat16),
                                pltpu.VMEM((BT, Sp, Dp), jnp.bfloat16)]),
            compiler_params=pltpu.CompilerParams(
                dimension_semantics=("parallel",),
                vmem_limit_bytes=vmem_limit),
            cost_estimate=cost,
        )(seed_arr, qpad, kpad, vpad, wq, wk, wv, bq, bk, bv)
        return jax.block_until_ready(out)

    try:
        out = _call(True)
    except Exception:
        # pipeline_mode / Buffered(1) not supported by this jax build:
        # fall back to default (double-buffered) weight blocks.
        out = _call(False)

    return out[:, :L, :D]


def _init_params(key, dim):
    # Deterministic synthetic init, mimicking nn.Linear's U(-1/sqrt(in), 1/sqrt(in)).
    bound = 1.0 / math.sqrt(dim)
    ks = jax.random.split(key, 6)
    mk = lambda k, shape: jax.random.uniform(k, shape, jnp.float32, -bound, bound)
    return {
        "wq": mk(ks[0], (dim, dim)),  # stored as (in, out) == W_torch.T
        "wk": mk(ks[1], (dim, dim)),
        "wv": mk(ks[2], (dim, dim)),
        "bq": mk(ks[3], (dim,)),
        "bk": mk(ks[4], (dim,)),
        "bv": mk(ks[5], (dim,)),
    }


def _reference(query, key, value, params, scale):
    # Pure-JAX f32 reference of the PyTorch forward (dropout=0).
    qp = query @ params["wq"] + params["bq"]
    kp = key @ params["wk"] + params["bk"]
    vp = value @ params["wv"] + params["bv"]
    scores = jnp.einsum("bld,bsd->bls", qp, kp) * scale
    attn = jax.nn.softmax(scores, axis=-1)
    return jnp.einsum("bls,bsd->bld", attn, vp)


if __name__ == "__main__":
    B, L, D = 2, 8, 32  # batch, seq, hidden
    root = jax.random.PRNGKey(0)
    k_params, k_q, k_k, k_v = jax.random.split(root, 4)

    params = _init_params(k_params, D)
    query = jax.random.normal(k_q, (B, L, D), jnp.float32)
    key = jax.random.normal(k_k, (B, L, D), jnp.float32)
    value = jax.random.normal(k_v, (B, L, D), jnp.float32)

    # dropout=0.0 for determinism (torch.dropout with p>0 is random anyway).
    out = single_head_attention(query, key, value, params, dropout_rate=0.0)
    out = jax.block_until_ready(out)

    ref = _reference(query, key, value, params, 1.0 / math.sqrt(D))
    assert out.shape == (B, L, D)
    # bf16 MXU operands (f32 accumulation) + approx reciprocal -> loose tolerance.
    assert jnp.allclose(out, ref, atol=3e-2, rtol=3e-2), float(jnp.max(jnp.abs(out - ref)))

    print("KERNEL_OK")
</pallas_src>

<mosaic_0001>
module attributes {stable_mosaic.version = 11 : i64} {
  func.func @_single_head_attention_kernel(%arg0: i32, %arg1: memref<1xi32, #tpu.memory_space<smem>>, %arg2: memref<1x16x128xbf16, #tpu.memory_space<vmem>>, %arg3: memref<1x16x128xbf16, #tpu.memory_space<vmem>>, %arg4: memref<1x16x128xbf16, #tpu.memory_space<vmem>>, %arg5: memref<128x128xbf16, #tpu.memory_space<vmem>>, %arg6: memref<128x128xbf16, #tpu.memory_space<vmem>>, %arg7: memref<128x128xbf16, #tpu.memory_space<vmem>>, %arg8: memref<1x128xf32, #tpu.memory_space<vmem>>, %arg9: memref<1x128xf32, #tpu.memory_space<vmem>>, %arg10: memref<1x128xf32, #tpu.memory_space<vmem>>, %arg11: memref<1x16x128xf32, #tpu.memory_space<vmem>>, %arg12: memref<1x16x128xbf16, #tpu.memory_space<vmem>>, %arg13: memref<1x16x128xbf16, #tpu.memory_space<vmem>>) attributes {dimension_semantics = [#tpu.dimension_semantics<parallel>], iteration_bounds = array<i64: 2>, scalar_prefetch = 1 : i64, scratch_operands = 2 : i64, tpu.core_type = #tpu.core_type<tc>, window_params = [{transform_indices = @transform_0, window_bounds = array<i64: 1, 16, 128>}, {transform_indices = @transform_1, window_bounds = array<i64: 1, 16, 128>}, {transform_indices = @transform_2, window_bounds = array<i64: 1, 16, 128>}, {pipeline_mode = #tpu.pipeline_mode<synchronous>, transform_indices = @transform_3, window_bounds = array<i64: 128, 128>}, {pipeline_mode = #tpu.pipeline_mode<synchronous>, transform_indices = @transform_4, window_bounds = array<i64: 128, 128>}, {pipeline_mode = #tpu.pipeline_mode<synchronous>, transform_indices = @transform_5, window_bounds = array<i64: 128, 128>}, {pipeline_mode = #tpu.pipeline_mode<synchronous>, transform_indices = @transform_6, window_bounds = array<i64: 1, 128>}, {pipeline_mode = #tpu.pipeline_mode<synchronous>, transform_indices = @transform_7, window_bounds = array<i64: 1, 128>}, {pipeline_mode = #tpu.pipeline_mode<synchronous>, transform_indices = @transform_8, window_bounds = array<i64: 1, 128>}, {transform_indices = @transform_9, window_bounds = array<i64: 1, 16, 128>}]} {
    %c0 = arith.constant 0 : index
    %c0_0 = arith.constant 0 : index
    %c0_1 = arith.constant 0 : index
    %0 = vector.load %arg2[%c0, %c0_0, %c0_1] : memref<1x16x128xbf16, #tpu.memory_space<vmem>>, vector<1x16x128xbf16>
    %1 = vector.shape_cast %0 : vector<1x16x128xbf16> to vector<16x128xbf16>
    %c0_2 = arith.constant 0 : index
    %c0_3 = arith.constant 0 : index
    %c0_4 = arith.constant 0 : index
    %2 = vector.load %arg3[%c0_2, %c0_3, %c0_4] : memref<1x16x128xbf16, #tpu.memory_space<vmem>>, vector<1x16x128xbf16>
    %3 = vector.shape_cast %2 : vector<1x16x128xbf16> to vector<16x128xbf16>
    %c0_5 = arith.constant 0 : index
    %c0_6 = arith.constant 0 : index
    %c0_7 = arith.constant 0 : index
    %4 = vector.load %arg4[%c0_5, %c0_6, %c0_7] : memref<1x16x128xbf16, #tpu.memory_space<vmem>>, vector<1x16x128xbf16>
    %5 = vector.shape_cast %4 : vector<1x16x128xbf16> to vector<16x128xbf16>
    %c0_8 = arith.constant 0 : index
    %c0_9 = arith.constant 0 : index
    %6 = vector.load %arg5[%c0_8, %c0_9] : memref<128x128xbf16, #tpu.memory_space<vmem>>, vector<128x128xbf16>
    %cst = arith.constant dense<0.000000e+00> : vector<16x128xf32>
    %7 = tpu.matmul %1, %6, %cst {dimension_numbers = #tpu.dot_dimension_numbers<[1], [0], [0], [1], [0, 0, 1, 1], [], []>} : vector<16x128xbf16>, vector<128x128xbf16>, vector<16x128xf32> -> vector<16x128xf32>
    %c0_10 = arith.constant 0 : index
    %c0_11 = arith.constant 0 : index
    %8 = vector.load %arg8[%c0_10, %c0_11] : memref<1x128xf32, #tpu.memory_space<vmem>>, vector<1x128xf32>
    %9 = vector.broadcast %8 : vector<1x128xf32> to vector<16x128xf32>
    %10 = arith.addf %7, %9 : vector<16x128xf32>
    %c0_12 = arith.constant 0 : index
    %c0_13 = arith.constant 0 : index
    %11 = vector.load %arg6[%c0_12, %c0_13] : memref<128x128xbf16, #tpu.memory_space<vmem>>, vector<128x128xbf16>
    %cst_14 = arith.constant dense<0.000000e+00> : vector<16x128xf32>
    %12 = tpu.matmul %3, %11, %cst_14 {dimension_numbers = #tpu.dot_dimension_numbers<[1], [0], [0], [1], [0, 0, 1, 1], [], []>} : vector<16x128xbf16>, vector<128x128xbf16>, vector<16x128xf32> -> vector<16x128xf32>
    %c0_15 = arith.constant 0 : index
    %c0_16 = arith.constant 0 : index
    %13 = vector.load %arg9[%c0_15, %c0_16] : memref<1x128xf32, #tpu.memory_space<vmem>>, vector<1x128xf32>
    %14 = vector.broadcast %13 : vector<1x128xf32> to vector<16x128xf32>
    %15 = arith.addf %12, %14 : vector<16x128xf32>
    %c0_17 = arith.constant 0 : index
    %c0_18 = arith.constant 0 : index
    %16 = vector.load %arg7[%c0_17, %c0_18] : memref<128x128xbf16, #tpu.memory_space<vmem>>, vector<128x128xbf16>
    %cst_19 = arith.constant dense<0.000000e+00> : vector<16x128xf32>
    %17 = tpu.matmul %5, %16, %cst_19 {dimension_numbers = #tpu.dot_dimension_numbers<[1], [0], [0], [1], [0, 0, 1, 1], [], []>} : vector<16x128xbf16>, vector<128x128xbf16>, vector<16x128xf32> -> vector<16x128xf32>
    %c0_20 = arith.constant 0 : index
    %c0_21 = arith.constant 0 : index
    %18 = vector.load %arg10[%c0_20, %c0_21] : memref<1x128xf32, #tpu.memory_space<vmem>>, vector<1x128xf32>
    %19 = vector.broadcast %18 : vector<1x128xf32> to vector<16x128xf32>
    %20 = arith.addf %17, %19 : vector<16x128xf32>
    %cst_22 = arith.constant 0.176776692 : f32
    %21 = vector.broadcast %cst_22 : f32 to vector<16x128xf32>
    %22 = arith.mulf %10, %21 : vector<16x128xf32>
    %23 = vector.shape_cast %22 : vector<16x128xf32> to vector<1x16x128xf32>
    %24 = arith.truncf %23 : vector<1x16x128xf32> to vector<1x16x128xbf16>
    %25 = vector.shape_cast %15 : vector<16x128xf32> to vector<1x16x128xf32>
    %26 = arith.truncf %25 : vector<1x16x128xf32> to vector<1x16x128xbf16>
    %c0_23 = arith.constant 0 : index
    %c0_24 = arith.constant 0 : index
    %c0_25 = arith.constant 0 : index
    %27 = vector.load %arg12[%c0_23, %c0_24, %c0_25] : memref<1x16x128xbf16, #tpu.memory_space<vmem>>, vector<1x16x128xbf16>
    tpu.vector_store %arg12[%c0_23, %c0_24, %c0_25], %26 {strides = array<i32>} : memref<1x16x128xbf16, #tpu.memory_space<vmem>>, vector<1x16x128xbf16>,
    %28 = vector.shape_cast %20 : vector<16x128xf32> to vector<1x16x128xf32>
    %29 = arith.truncf %28 : vector<1x16x128xf32> to vector<1x16x128xbf16>
    %c0_26 = arith.constant 0 : index
    %c0_27 = arith.constant 0 : index
    %c0_28 = arith.constant 0 : index
    %30 = vector.load %arg13[%c0_26, %c0_27, %c0_28] : memref<1x16x128xbf16, #tpu.memory_space<vmem>>, vector<1x16x128xbf16>
    tpu.vector_store %arg13[%c0_26, %c0_27, %c0_28], %29 {strides = array<i32>} : memref<1x16x128xbf16, #tpu.memory_space<vmem>>, vector<1x16x128xbf16>,
    %cst_29 = arith.constant 0xFF800000 : f32
    %31 = vector.broadcast %cst_29 : f32 to vector<1x16x1xf32>
    %cst_30 = arith.constant 0.000000e+00 : f32
    %32 = vector.broadcast %cst_30 : f32 to vector<1x16x1xf32>
    %cst_31 = arith.constant 0.000000e+00 : f32
    %33 = vector.broadcast %cst_31 : f32 to vector<1x16x128xf32>
    %c0_32 = arith.constant 0 : index
    %c0_33 = arith.constant 0 : index
    %c0_34 = arith.constant 0 : index
    %34 = vector.load %arg12[%c0_32, %c0_33, %c0_34] : memref<1x16x128xbf16, #tpu.memory_space<vmem>>, vector<1x16x128xbf16>
    %c0_35 = arith.constant 0 : index
    %c0_36 = arith.constant 0 : index
    %c0_37 = arith.constant 0 : index
    %35 = vector.load %arg13[%c0_35, %c0_36, %c0_37] : memref<1x16x128xbf16, #tpu.memory_space<vmem>>, vector<1x16x128xbf16>
    "tpu.trace_start"() <{level = 10 : i32, message = "bld,bsd->bls"}> : () -> ()
    %cst_38 = arith.constant dense<0.000000e+00> : vector<1x16x16xf32>
    %36 = tpu.matmul %24, %34, %cst_38 {dimension_numbers = #tpu.dot_dimension_numbers<[2], [2], [1], [1], [0, 0, 0, 1, 1, 1], [0], [0]>} : vector<1x16x128xbf16>, vector<1x16x128xbf16>, vector<1x16x16xf32> -> vector<1x16x16xf32>
    "tpu.trace_stop"() : () -> ()
    %37 = tpu.iota {dimensions = array<i32: 2>} : vector<1x16x16xi32>
    %c0_i32 = arith.constant 0 : i32
    %38 = vector.broadcast %c0_i32 : i32 to vector<1x16x16xi32>
    %39 = arith.addi %37, %38 : vector<1x16x16xi32>
    %c8_i32 = arith.constant 8 : i32
    %40 = vector.broadcast %c8_i32 : i32 to vector<1x16x16xi32>
    %41 = arith.cmpi slt, %39, %40 : vector<1x16x16xi32>
    %cst_39 = arith.constant -1.000000e+30 : f32
    %42 = vector.broadcast %cst_39 : f32 to vector<1x16x16xf32>
    %43 = arith.select %41, %36, %42 : vector<1x16x16xi1>, vector<1x16x16xf32>
    %cst_40 = arith.constant dense<0xFF800000> : vector<1x16xf32>
    %44 = vector.multi_reduction <maximumf>, %43, %cst_40 [2] : vector<1x16x16xf32> to vector<1x16xf32>
    %45 = vector.shape_cast %44 : vector<1x16xf32> to vector<1x16x1xf32>
    %46 = arith.maximumf %31, %45 : vector<1x16x1xf32>
    %47 = arith.subf %31, %46 : vector<1x16x1xf32>
    %48 = math.exp %47 : vector<1x16x1xf32>
    %49 = vector.broadcast %46 : vector<1x16x1xf32> to vector<1x16x16xf32>
    %50 = arith.subf %43, %49 : vector<1x16x16xf32>
    %51 = math.exp %50 : vector<1x16x16xf32>
    %52 = arith.mulf %48, %32 : vector<1x16x1xf32>
    %cst_41 = arith.constant dense<0.000000e+00> : vector<1x16xf32>
    %53 = vector.multi_reduction <add>, %51, %cst_41 [2] : vector<1x16x16xf32> to vector<1x16xf32>
    %54 = vector.shape_cast %53 : vector<1x16xf32> to vector<1x16x1xf32>
    %55 = arith.addf %52, %54 : vector<1x16x1xf32>
    %56 = vector.broadcast %48 : vector<1x16x1xf32> to vector<1x16x128xf32>
    %57 = arith.mulf %56, %33 : vector<1x16x128xf32>
    %58 = arith.truncf %51 : vector<1x16x16xf32> to vector<1x16x16xbf16>
    "tpu.trace_start"() <{level = 10 : i32, message = "bls,bsd->bld"}> : () -> ()
    %cst_42 = arith.constant dense<0.000000e+00> : vector<1x16x128xf32>
    %59 = tpu.matmul %58, %35, %cst_42 {dimension_numbers = #tpu.dot_dimension_numbers<[2], [1], [1], [2], [0, 0, 0, 1, 1, 2], [0], [0]>} : vector<1x16x16xbf16>, vector<1x16x128xbf16>, vector<1x16x128xf32> -> vector<1x16x128xf32>
    "tpu.trace_stop"() : () -> ()
    %60 = arith.addf %57, %59 : vector<1x16x128xf32>
    %61 = tpu.reciprocal %55 {approx = true} : vector<1x16x1xf32> -> vector<1x16x1xf32>
    %62 = vector.broadcast %61 : vector<1x16x1xf32> to vector<1x16x128xf32>
    %63 = arith.mulf %60, %62 : vector<1x16x128xf32>
    %c0_43 = arith.constant 0 : index
    %c0_44 = arith.constant 0 : index
    %c0_45 = arith.constant 0 : index
    %64 = vector.load %arg11[%c0_43, %c0_44, %c0_45] : memref<1x16x128xf32, #tpu.memory_space<vmem>>, vector<1x16x128xf32>
    tpu.vector_store %arg11[%c0_43, %c0_44, %c0_45], %63 {strides = array<i32>} : memref<1x16x128xf32, #tpu.memory_space<vmem>>, vector<1x16x128xf32>,
    return
  }
  func.func @transform_0(%arg0: i32, %arg1: memref<1xi32, #tpu.memory_space<smem>>) -> (i32, i32, i32) {
    %c0_i32 = arith.constant 0 : i32
    %c0_i32_0 = arith.constant 0 : i32
    %c0_i32_1 = arith.constant 0 : i32
    return %arg0, %c0_i32, %c0_i32_0 : i32, i32, i32
  }
  func.func @transform_1(%arg0: i32, %arg1: memref<1xi32, #tpu.memory_space<smem>>) -> (i32, i32, i32) {
    %c0_i32 = arith.constant 0 : i32
    %c0_i32_0 = arith.constant 0 : i32
    %c0_i32_1 = arith.constant 0 : i32
    return %arg0, %c0_i32, %c0_i32_0 : i32, i32, i32
  }
  func.func @transform_2(%arg0: i32, %arg1: memref<1xi32, #tpu.memory_space<smem>>) -> (i32, i32, i32) {
    %c0_i32 = arith.constant 0 : i32
    %c0_i32_0 = arith.constant 0 : i32
    %c0_i32_1 = arith.constant 0 : i32
    return %arg0, %c0_i32, %c0_i32_0 : i32, i32, i32
  }
  func.func @transform_3(%arg0: i32, %arg1: memref<1xi32, #tpu.memory_space<smem>>) -> (i32, i32) {
    %c0_i32 = arith.constant 0 : i32
    %c0_i32_0 = arith.constant 0 : i32
    %c0_i32_1 = arith.constant 0 : i32
    return %c0_i32, %c0_i32_0 : i32, i32
  }
  func.func @transform_4(%arg0: i32, %arg1: memref<1xi32, #tpu.memory_space<smem>>) -> (i32, i32) {
    %c0_i32 = arith.constant 0 : i32
    %c0_i32_0 = arith.constant 0 : i32
    %c0_i32_1 = arith.constant 0 : i32
    return %c0_i32, %c0_i32_0 : i32, i32
  }
  func.func @transform_5(%arg0: i32, %arg1: memref<1xi32, #tpu.memory_space<smem>>) -> (i32, i32) {
    %c0_i32 = arith.constant 0 : i32
    %c0_i32_0 = arith.constant 0 : i32
    %c0_i32_1 = arith.constant 0 : i32
    return %c0_i32, %c0_i32_0 : i32, i32
  }
  func.func @transform_6(%arg0: i32, %arg1: memref<1xi32, #tpu.memory_space<smem>>) -> (i32, i32) {
    %c0_i32 = arith.constant 0 : i32
    %c0_i32_0 = arith.constant 0 : i32
    %c0_i32_1 = arith.constant 0 : i32
    return %c0_i32, %c0_i32_0 : i32, i32
  }
  func.func @transform_7(%arg0: i32, %arg1: memref<1xi32, #tpu.memory_space<smem>>) -> (i32, i32) {
    %c0_i32 = arith.constant 0 : i32
    %c0_i32_0 = arith.constant 0 : i32
    %c0_i32_1 = arith.constant 0 : i32
    return %c0_i32, %c0_i32_0 : i32, i32
  }
  func.func @transform_8(%arg0: i32, %arg1: memref<1xi32, #tpu.memory_space<smem>>) -> (i32, i32) {
    %c0_i32 = arith.constant 0 : i32
    %c0_i32_0 = arith.constant 0 : i32
    %c0_i32_1 = arith.constant 0 : i32
    return %c0_i32, %c0_i32_0 : i32, i32
  }
  func.func @transform_9(%arg0: i32, %arg1: memref<1xi32, #tpu.memory_space<smem>>) -> (i32, i32, i32) {
    %c0_i32 = arith.constant 0 : i32
    %c0_i32_0 = arith.constant 0 : i32
    %c0_i32_1 = arith.constant 0 : i32
    return %arg0, %c0_i32, %c0_i32_0 : i32, i32, i32
  }
}

module attributes {stable_mosaic.version = 11 : i64} {
  func.func @_single_head_attention_kernel(%arg0: i32, %arg1: memref<1xi32, #tpu.memory_space<smem>>, %arg2: memref<1x16x128xbf16, #tpu.memory_space<vmem>>, %arg3: memref<1x16x128xbf16, #tpu.memory_space<vmem>>, %arg4: memref<1x16x128xbf16, #tpu.memory_space<vmem>>, %arg5: memref<128x128xbf16, #tpu.memory_space<vmem>>, %arg6: memref<128x128xbf16, #tpu.memory_space<vmem>>, %arg7: memref<128x128xbf16, #tpu.memory_space<vmem>>, %arg8: memref<1x128xf32, #tpu.memory_space<vmem>>, %arg9: memref<1x128xf32, #tpu.memory_space<vmem>>, %arg10: memref<1x128xf32, #tpu.memory_space<vmem>>, %arg11: memref<1x16x128xf32, #tpu.memory_space<vmem>>, %arg12: memref<1x16x128xbf16, #tpu.memory_space<vmem>>, %arg13: memref<1x16x128xbf16, #tpu.memory_space<vmem>>) attributes {dimension_semantics = [#tpu.dimension_semantics<parallel>], iteration_bounds = array<i64: 2>, scalar_prefetch = 1 : i64, scratch_operands = 2 : i64, tpu.core_type = #tpu.core_type<tc>, window_params = [{transform_indices = @transform_0, window_bounds = array<i64: 1, 16, 128>}, {transform_indices = @transform_1, window_bounds = array<i64: 1, 16, 128>}, {transform_indices = @transform_2, window_bounds = array<i64: 1, 16, 128>}, {pipeline_mode = #tpu.pipeline_mode<synchronous>, transform_indices = @transform_3, window_bounds = array<i64: 128, 128>}, {pipeline_mode = #tpu.pipeline_mode<synchronous>, transform_indices = @transform_4, window_bounds = array<i64: 128, 128>}, {pipeline_mode = #tpu.pipeline_mode<synchronous>, transform_indices = @transform_5, window_bounds = array<i64: 128, 128>}, {pipeline_mode = #tpu.pipeline_mode<synchronous>, transform_indices = @transform_6, window_bounds = array<i64: 1, 128>}, {pipeline_mode = #tpu.pipeline_mode<synchronous>, transform_indices = @transform_7, window_bounds = array<i64: 1, 128>}, {pipeline_mode = #tpu.pipeline_mode<synchronous>, transform_indices = @transform_8, window_bounds = array<i64: 1, 128>}, {transform_indices = @transform_9, window_bounds = array<i64: 1, 16, 128>}]} {
    %c0 = arith.constant 0 : index
    %c0_0 = arith.constant 0 : index
    %c0_1 = arith.constant 0 : index
    %0 = vector.load %arg2[%c0, %c0_0, %c0_1] : memref<1x16x128xbf16, #tpu.memory_space<vmem>>, vector<1x16x128xbf16>
    %1 = vector.shape_cast %0 : vector<1x16x128xbf16> to vector<16x128xbf16>
    %c0_2 = arith.constant 0 : index
    %c0_3 = arith.constant 0 : index
    %c0_4 = arith.constant 0 : index
    %2 = vector.load %arg3[%c0_2, %c0_3, %c0_4] : memref<1x16x128xbf16, #tpu.memory_space<vmem>>, vector<1x16x128xbf16>
    %3 = vector.shape_cast %2 : vector<1x16x128xbf16> to vector<16x128xbf16>
    %c0_5 = arith.constant 0 : index
    %c0_6 = arith.constant 0 : index
    %c0_7 = arith.constant 0 : index
    %4 = vector.load %arg4[%c0_5, %c0_6, %c0_7] : memref<1x16x128xbf16, #tpu.memory_space<vmem>>, vector<1x16x128xbf16>
    %5 = vector.shape_cast %4 : vector<1x16x128xbf16> to vector<16x128xbf16>
    %c0_8 = arith.constant 0 : index
    %c0_9 = arith.constant 0 : index
    %6 = vector.load %arg5[%c0_8, %c0_9] : memref<128x128xbf16, #tpu.memory_space<vmem>>, vector<128x128xbf16>
    %cst = arith.constant dense<0.000000e+00> : vector<16x128xf32>
    %7 = tpu.matmul %1, %6, %cst {dimension_numbers = #tpu.dot_dimension_numbers<[1], [0], [0], [1], [0, 0, 1, 1], [], []>} : vector<16x128xbf16>, vector<128x128xbf16>, vector<16x128xf32> -> vector<16x128xf32>
    %c0_10 = arith.constant 0 : index
    %c0_11 = arith.constant 0 : index
    %8 = vector.load %arg8[%c0_10, %c0_11] : memref<1x128xf32, #tpu.memory_space<vmem>>, vector<1x128xf32>
    %9 = vector.broadcast %8 : vector<1x128xf32> to vector<16x128xf32>
    %10 = arith.addf %7, %9 : vector<16x128xf32>
    %c0_12 = arith.constant 0 : index
    %c0_13 = arith.constant 0 : index
    %11 = vector.load %arg6[%c0_12, %c0_13] : memref<128x128xbf16, #tpu.memory_space<vmem>>, vector<128x128xbf16>
    %cst_14 = arith.constant dense<0.000000e+00> : vector<16x128xf32>
    %12 = tpu.matmul %3, %11, %cst_14 {dimension_numbers = #tpu.dot_dimension_numbers<[1], [0], [0], [1], [0, 0, 1, 1], [], []>} : vector<16x128xbf16>, vector<128x128xbf16>, vector<16x128xf32> -> vector<16x128xf32>
    %c0_15 = arith.constant 0 : index
    %c0_16 = arith.constant 0 : index
    %13 = vector.load %arg9[%c0_15, %c0_16] : memref<1x128xf32, #tpu.memory_space<vmem>>, vector<1x128xf32>
    %14 = vector.broadcast %13 : vector<1x128xf32> to vector<16x128xf32>
    %15 = arith.addf %12, %14 : vector<16x128xf32>
    %c0_17 = arith.constant 0 : index
    %c0_18 = arith.constant 0 : index
    %16 = vector.load %arg7[%c0_17, %c0_18] : memref<128x128xbf16, #tpu.memory_space<vmem>>, vector<128x128xbf16>
    %cst_19 = arith.constant dense<0.000000e+00> : vector<16x128xf32>
    %17 = tpu.matmul %5, %16, %cst_19 {dimension_numbers = #tpu.dot_dimension_numbers<[1], [0], [0], [1], [0, 0, 1, 1], [], []>} : vector<16x128xbf16>, vector<128x128xbf16>, vector<16x128xf32> -> vector<16x128xf32>
    %c0_20 = arith.constant 0 : index
    %c0_21 = arith.constant 0 : index
    %18 = vector.load %arg10[%c0_20, %c0_21] : memref<1x128xf32, #tpu.memory_space<vmem>>, vector<1x128xf32>
    %19 = vector.broadcast %18 : vector<1x128xf32> to vector<16x128xf32>
    %20 = arith.addf %17, %19 : vector<16x128xf32>
    %cst_22 = arith.constant 0.176776692 : f32
    %21 = vector.broadcast %cst_22 : f32 to vector<16x128xf32>
    %22 = arith.mulf %10, %21 : vector<16x128xf32>
    %23 = vector.shape_cast %22 : vector<16x128xf32> to vector<1x16x128xf32>
    %24 = arith.truncf %23 : vector<1x16x128xf32> to vector<1x16x128xbf16>
    %25 = vector.shape_cast %15 : vector<16x128xf32> to vector<1x16x128xf32>
    %26 = arith.truncf %25 : vector<1x16x128xf32> to vector<1x16x128xbf16>
    %c0_23 = arith.constant 0 : index
    %c0_24 = arith.constant 0 : index
    %c0_25 = arith.constant 0 : index
    %27 = vector.load %arg12[%c0_23, %c0_24, %c0_25] : memref<1x16x128xbf16, #tpu.memory_space<vmem>>, vector<1x16x128xbf16>
    tpu.vector_store %arg12[%c0_23, %c0_24, %c0_25], %26 {strides = array<i32>} : memref<1x16x128xbf16, #tpu.memory_space<vmem>>, vector<1x16x128xbf16>,
    %28 = vector.shape_cast %20 : vector<16x128xf32> to vector<1x16x128xf32>
    %29 = arith.truncf %28 : vector<1x16x128xf32> to vector<1x16x128xbf16>
    %c0_26 = arith.constant 0 : index
    %c0_27 = arith.constant 0 : index
    %c0_28 = arith.constant 0 : index
    %30 = vector.load %arg13[%c0_26, %c0_27, %c0_28] : memref<1x16x128xbf16, #tpu.memory_space<vmem>>, vector<1x16x128xbf16>
    tpu.vector_store %arg13[%c0_26, %c0_27, %c0_28], %29 {strides = array<i32>} : memref<1x16x128xbf16, #tpu.memory_space<vmem>>, vector<1x16x128xbf16>,
    %cst_29 = arith.constant 0xFF800000 : f32
    %31 = vector.broadcast %cst_29 : f32 to vector<1x16x1xf32>
    %cst_30 = arith.constant 0.000000e+00 : f32
    %32 = vector.broadcast %cst_30 : f32 to vector<1x16x1xf32>
    %cst_31 = arith.constant 0.000000e+00 : f32
    %33 = vector.broadcast %cst_31 : f32 to vector<1x16x128xf32>
    %c0_32 = arith.constant 0 : index
    %c0_33 = arith.constant 0 : index
    %c0_34 = arith.constant 0 : index
    %34 = vector.load %arg12[%c0_32, %c0_33, %c0_34] : memref<1x16x128xbf16, #tpu.memory_space<vmem>>, vector<1x16x128xbf16>
    %c0_35 = arith.constant 0 : index
    %c0_36 = arith.constant 0 : index
    %c0_37 = arith.constant 0 : index
    %35 = vector.load %arg13[%c0_35, %c0_36, %c0_37] : memref<1x16x128xbf16, #tpu.memory_space<vmem>>, vector<1x16x128xbf16>
    "tpu.trace_start"() <{level = 10 : i32, message = "bld,bsd->bls"}> : () -> ()
    %cst_38 = arith.constant dense<0.000000e+00> : vector<1x16x16xf32>
    %36 = tpu.matmul %24, %34, %cst_38 {dimension_numbers = #tpu.dot_dimension_numbers<[2], [2], [1], [1], [0, 0, 0, 1, 1, 1], [0], [0]>} : vector<1x16x128xbf16>, vector<1x16x128xbf16>, vector<1x16x16xf32> -> vector<1x16x16xf32>
    "tpu.trace_stop"() : () -> ()
    %37 = tpu.iota {dimensions = array<i32: 2>} : vector<1x16x16xi32>
    %c0_i32 = arith.constant 0 : i32
    %38 = vector.broadcast %c0_i32 : i32 to vector<1x16x16xi32>
    %39 = arith.addi %37, %38 : vector<1x16x16xi32>
    %c8_i32 = arith.constant 8 : i32
    %40 = vector.broadcast %c8_i32 : i32 to vector<1x16x16xi32>
    %41 = arith.cmpi slt, %39, %40 : vector<1x16x16xi32>
    %cst_39 = arith.constant -1.000000e+30 : f32
    %42 = vector.broadcast %cst_39 : f32 to vector<1x16x16xf32>
    %43 = arith.select %41, %36, %42 : vector<1x16x16xi1>, vector<1x16x16xf32>
    %cst_40 = arith.constant dense<0xFF800000> : vector<1x16xf32>
    %44 = vector.multi_reduction <maximumf>, %43, %cst_40 [2] : vector<1x16x16xf32> to vector<1x16xf32>
    %45 = vector.shape_cast %44 : vector<1x16xf32> to vector<1x16x1xf32>
    %46 = arith.maximumf %31, %45 : vector<1x16x1xf32>
    %47 = arith.subf %31, %46 : vector<1x16x1xf32>
    %48 = math.exp %47 : vector<1x16x1xf32>
    %49 = vector.broadcast %46 : vector<1x16x1xf32> to vector<1x16x16xf32>
    %50 = arith.subf %43, %49 : vector<1x16x16xf32>
    %51 = math.exp %50 : vector<1x16x16xf32>
    %52 = arith.mulf %48, %32 : vector<1x16x1xf32>
    %cst_41 = arith.constant dense<0.000000e+00> : vector<1x16xf32>
    %53 = vector.multi_reduction <add>, %51, %cst_41 [2] : vector<1x16x16xf32> to vector<1x16xf32>
    %54 = vector.shape_cast %53 : vector<1x16xf32> to vector<1x16x1xf32>
    %55 = arith.addf %52, %54 : vector<1x16x1xf32>
    %56 = vector.broadcast %48 : vector<1x16x1xf32> to vector<1x16x128xf32>
    %57 = arith.mulf %56, %33 : vector<1x16x128xf32>
    %58 = arith.truncf %51 : vector<1x16x16xf32> to vector<1x16x16xbf16>
    "tpu.trace_start"() <{level = 10 : i32, message = "bls,bsd->bld"}> : () -> ()
    %cst_42 = arith.constant dense<0.000000e+00> : vector<1x16x128xf32>
    %59 = tpu.matmul %58, %35, %cst_42 {dimension_numbers = #tpu.dot_dimension_numbers<[2], [1], [1], [2], [0, 0, 0, 1, 1, 2], [0], [0]>} : vector<1x16x16xbf16>, vector<1x16x128xbf16>, vector<1x16x128xf32> -> vector<1x16x128xf32>
    "tpu.trace_stop"() : () -> ()
    %60 = arith.addf %57, %59 : vector<1x16x128xf32>
    %61 = tpu.reciprocal %55 {approx = true} : vector<1x16x1xf32> -> vector<1x16x1xf32>
    %62 = vector.broadcast %61 : vector<1x16x1xf32> to vector<1x16x128xf32>
    %63 = arith.mulf %60, %62 : vector<1x16x128xf32>
    %c0_43 = arith.constant 0 : index
    %c0_44 = arith.constant 0 : index
    %c0_45 = arith.constant 0 : index
    %64 = vector.load %arg11[%c0_43, %c0_44, %c0_45] : memref<1x16x128xf32, #tpu.memory_space<vmem>>, vector<1x16x128xf32>
    tpu.vector_store %arg11[%c0_43, %c0_44, %c0_45], %63 {strides = array<i32>} : memref<1x16x128xf32, #tpu.memory_space<vmem>>, vector<1x16x128xf32>,
    return
  }
  func.func @transform_0(%arg0: i32, %arg1: memref<1xi32, #tpu.memory_space<smem>>) -> (i32, i32, i32) {
    %c0_i32 = arith.constant 0 : i32
    %c0_i32_0 = arith.constant 0 : i32
    %c0_i32_1 = arith.constant 0 : i32
    return %arg0, %c0_i32, %c0_i32_0 : i32, i32, i32
  }
  func.func @transform_1(%arg0: i32, %arg1: memref<1xi32, #tpu.memory_space<smem>>) -> (i32, i32, i32) {
    %c0_i32 = arith.constant 0 : i32
    %c0_i32_0 = arith.constant 0 : i32
    %c0_i32_1 = arith.constant 0 : i32
    return %arg0, %c0_i32, %c0_i32_0 : i32, i32, i32
  }
  func.func @transform_2(%arg0: i32, %arg1: memref<1xi32, #tpu.memory_space<smem>>) -> (i32, i32, i32) {
    %c0_i32 = arith.constant 0 : i32
    %c0_i32_0 = arith.constant 0 : i32
    %c0_i32_1 = arith.constant 0 : i32
    return %arg0, %c0_i32, %c0_i32_0 : i32, i32, i32
  }
  func.func @transform_3(%arg0: i32, %arg1: memref<1xi32, #tpu.memory_space<smem>>) -> (i32, i32) {
    %c0_i32 = arith.constant 0 : i32
    %c0_i32_0 = arith.constant 0 : i32
    %c0_i32_1 = arith.constant 0 : i32
    return %c0_i32, %c0_i32_0 : i32, i32
  }
  func.func @transform_4(%arg0: i32, %arg1: memref<1xi32, #tpu.memory_space<smem>>) -> (i32, i32) {
    %c0_i32 = arith.constant 0 : i32
    %c0_i32_0 = arith.constant 0 : i32
    %c0_i32_1 = arith.constant 0 : i32
    return %c0_i32, %c0_i32_0 : i32, i32
  }
  func.func @transform_5(%arg0: i32, %arg1: memref<1xi32, #tpu.memory_space<smem>>) -> (i32, i32) {
    %c0_i32 = arith.constant 0 : i32
    %c0_i32_0 = arith.constant 0 : i32
    %c0_i32_1 = arith.constant 0 : i32
    return %c0_i32, %c0_i32_0 : i32, i32
  }
  func.func @transform_6(%arg0: i32, %arg1: memref<1xi32, #tpu.memory_space<smem>>) -> (i32, i32) {
    %c0_i32 = arith.constant 0 : i32
    %c0_i32_0 = arith.constant 0 : i32
    %c0_i32_1 = arith.constant 0 : i32
    return %c0_i32, %c0_i32_0 : i32, i32
  }
  func.func @transform_7(%arg0: i32, %arg1: memref<1xi32, #tpu.memory_space<smem>>) -> (i32, i32) {
    %c0_i32 = arith.constant 0 : i32
    %c0_i32_0 = arith.constant 0 : i32
    %c0_i32_1 = arith.constant 0 : i32
    return %c0_i32, %c0_i32_0 : i32, i32
  }
  func.func @transform_8(%arg0: i32, %arg1: memref<1xi32, #tpu.memory_space<smem>>) -> (i32, i32) {
    %c0_i32 = arith.constant 0 : i32
    %c0_i32_0 = arith.constant 0 : i32
    %c0_i32_1 = arith.constant 0 : i32
    return %c0_i32, %c0_i32_0 : i32, i32
  }
  func.func @transform_9(%arg0: i32, %arg1: memref<1xi32, #tpu.memory_space<smem>>) -> (i32, i32, i32) {
    %c0_i32 = arith.constant 0 : i32
    %c0_i32_0 = arith.constant 0 : i32
    %c0_i32_1 = arith.constant 0 : i32
    return %arg0, %c0_i32, %c0_i32_0 : i32, i32, i32
  }
}

</mosaic_0001>

<llo_original>
// kernel: tpu_custom_call.1
$region0: #{tpu_custom_call.1}
  #allocation0 [shape = 'u32[]', space=smem, size = 0x4, offset = 0x4, fixed_abs, tag = 'smem constant byte address 0x4 - core index']
  #allocation1 [shape = 'u32[144,128]{1,0:T(1,128)}', space=vmem, size = 0x12000, scoped, tag = 'internal scratch']
  #allocation2 [shape = 'bf16[1,16,128]{2,1,0:T(8,128)(2,1)}', space=vmem, size = 0x1000, scoped, tag = 'scratch operand']
  #allocation3 [shape = 'bf16[1,16,128]{2,1,0:T(8,128)(2,1)}', space=vmem, size = 0x1000, scoped, tag = 'scratch operand']
  #allocation4 [shape = 's32[1]{0}', space=sflag, size = 0x4, scoped, tag = 'scoped memory for tpu_custom_call.1']
  #allocation5 [shape = 's32[1]{0:T(128)S(6)}', space=smem, size = 0x200, scoped, tag = 'prefetched SMEM operand 0']
  %s0 = inlined_call_operand.<no memory space> [shape: s32[1], index: 0, kind: input, shape index: {}]
  %s1 = inlined_call_operand.hbm [shape: bf16[2,16,128], index: 1, kind: input, shape index: {}]
  %s2 = inlined_call_operand.hbm [shape: bf16[2,16,128], index: 2, kind: input, shape index: {}]
  %s3 = inlined_call_operand.hbm [shape: bf16[2,16,128], index: 3, kind: input, shape index: {}]
  %s4 = inlined_call_operand.hbm [shape: bf16[128,128], index: 4, kind: input, shape index: {}]
  %s5 = inlined_call_operand.hbm [shape: bf16[128,128], index: 5, kind: input, shape index: {}]
  %s6 = inlined_call_operand.hbm [shape: bf16[128,128], index: 6, kind: input, shape index: {}]
  %s7 = inlined_call_operand.vmem [shape: f32[1,128], index: 7, kind: input, shape index: {}]
  %s8 = inlined_call_operand.vmem [shape: f32[1,128], index: 8, kind: input, shape index: {}]
  %s9 = inlined_call_operand.vmem [shape: f32[1,128], index: 9, kind: input, shape index: {}]
  %s10 = inlined_call_operand.hbm [shape: f32[2,16,128], index: 10, kind: output, shape index: {}]
  %s11 = sld [smem:[#allocation0]]
  $region93: #{tpu_custom_call.1} parent=0
    _
  %s13 = ssub.s32 1, %s11
  %s14 = scalar_select 0, %s13, %s11
  %15 = sst [smem:[#allocation5]] %s0
  $region1: #{tpu_custom_call.1} parent=0
    #allocation6 [shape = 'u8[8192]{0}', space=vmem, size = 0x2000, scoped, tag = 'input window, operand 1']
    #allocation7 [shape = 's32[2]{0}', space=sflag, size = 0x8, scoped, tag = 'scoped memory for tpu_custom_call.1']
    #allocation8 [shape = 's32[2]{0}', space=sflag, size = 0x8, scoped, tag = 'scoped memory for tpu_custom_call.1']
    #allocation9 [shape = 'u8[8192]{0}', space=vmem, size = 0x2000, scoped, tag = 'input window, operand 2']
    #allocation10 [shape = 's32[2]{0}', space=sflag, size = 0x8, scoped, tag = 'scoped memory for tpu_custom_call.1']
    #allocation11 [shape = 'u8[8192]{0}', space=vmem, size = 0x2000, scoped, tag = 'input window, operand 3']
    #allocation12 [shape = 'u8[32768]{0}', space=vmem, size = 0x8000, scoped, tag = 'input window, operand 4, single buffered']
    #allocation13 [shape = 's32[1]{0}', space=sflag, size = 0x4, scoped, tag = 'scoped memory for tpu_custom_call.1']
    #allocation14 [shape = 'u8[32768]{0}', space=vmem, size = 0x8000, scoped, tag = 'input window, operand 5, single buffered']
    #allocation15 [shape = 'u8[32768]{0}', space=vmem, size = 0x8000, scoped, tag = 'input window, operand 6, single buffered']
    #allocation16 [shape = 's32[1]{0}', space=sflag, size = 0x4, scoped, tag = 'scoped memory for tpu_custom_call.1']
    #allocation17 [shape = 'u8[16384]{0}', space=vmem, size = 0x4000, scoped, tag = 'output window, operand 0']
    %16 = vsyncpa [#allocation7], 0
    %s17 = scalar_lea.sflag [#allocation7], 1
    %18 = vsyncpa %s17, 0
    %19 = vsyncpa [#allocation10], 0
    %s20 = scalar_lea.sflag [#allocation10], 1
    %21 = vsyncpa %s20, 0
    %22 = vsyncpa [#allocation13], 0
    %23 = vsyncpa [#allocation16], 0
    %24 = vsyncpa [#allocation8], 0
    %s25 = scalar_lea.sflag [#allocation8], 1
    %26 = vsyncpa %s25, 0
    loop: start=0, step=1, limit=4
    $region2: #{tpu_custom_call.1} parent=1 // loop_pre_header
      _
    $region3: #{tpu_custom_call.1} parent=1 // loop_header
      %s28 = sphi 0, %s32
      %p29 = scmp.ge.s32.totalorder %s28, 4
      %s38 = sphi 0, %s40
      %s41 = sphi 0, %s38
      %s42 = sphi 0, %s41
      %s58 = sphi 0, %s42
      %s64 = sphi 0, %s66
      %s67 = sphi 0, %s64
      %s68 = sphi 0, %s67
      %s84 = sphi 0, %s68
      %s90 = sphi 0, %s92
      %s93 = sphi 0, %s90
      %s94 = sphi 0, %s93
      %s110 = sphi 0, %s94
      %s114 = sphi 0, %s114
      %s116 = sphi 0, %s114
      %s117 = sphi 0, %s116
      %s131 = sphi 0, %s117
      %s135 = sphi 0, %s135
      %s137 = sphi 0, %s135
      %s138 = sphi 0, %s137
      %s152 = sphi 0, %s138
      %s156 = sphi 0, %s156
      %s158 = sphi 0, %s156
      %s159 = sphi 0, %s158
      %s173 = sphi 0, %s159
      %s177 = sphi 0, %s177
      %s179 = sphi 0, %s177
      %s180 = sphi 0, %s179
      %s194 = sphi 0, %s180
      %s198 = sphi 0, %s198
      %s200 = sphi 0, %s198
      %s201 = sphi 0, %s200
      %s215 = sphi 0, %s201
      %s219 = sphi 0, %s219
      %s221 = sphi 0, %s219
      %s222 = sphi 0, %s221
      %s236 = sphi 0, %s222
      %s242 = sphi 0, %s244
      %s245 = sphi 0, %s242
      %s246 = sphi 0, %s245
      %s262 = sphi 0, %s246
    $region4: #{tpu_custom_call.1} parent=1 // loop_header_branch
      %31 = sbr.rel (%p29) target = $region8
    $region5: #{tpu_custom_call.1} parent=1 // loop_body
      %s33 = ssub.s32 %s28, 1
      %s34 = ssub.s32 %s28, 2
      %s35 = sadd.s32 %s28, 1
      %s36 = ssub.s32 %s28, %s35
      %p37 = scmp.eq.s32.totalorder %s36, 0
      %s39 = sadd.s32 %s38, 1
      %s40 = scalar_select %p37, %s38, %s39
      %p43 = pneg %p37
      %p44 = scmp.eq.s32.totalorder %s28, 1
      %p45 = por %p43, %p44
      %p46 = scmp.ne.s32.totalorder %s38, %s41
      %p47 = scmp.eq.s32.totalorder %s28, 0
      %p48 = por %p46, %p47
      %p49 = scmp.ne.s32.totalorder %s38, %s41
      %p50 = scmp.eq.s32.totalorder %s33, 1
      %p51 = por %p49, %p50
      %p52 = scmp.ne.s32.totalorder %s41, %s42
      %p53 = scmp.eq.s32.totalorder %s33, 0
      %p54 = por %p52, %p53
      %p55 = scmp.ne.s32.totalorder %s41, %s42
      %p56 = scmp.eq.s32.totalorder %s34, 1
      %p57 = por %p55, %p56
      %p59 = scmp.ne.s32.totalorder %s42, %s58
      %p60 = scmp.eq.s32.totalorder %s34, 0
      %p61 = por %p59, %p60
      %s62 = ssub.s32 %s28, %s35
      %p63 = scmp.eq.s32.totalorder %s62, 0
      %s65 = sadd.s32 %s64, 1
      %s66 = scalar_select %p63, %s64, %s65
      %p69 = pneg %p63
      %p70 = scmp.eq.s32.totalorder %s28, 1
      %p71 = por %p69, %p70
      %p72 = scmp.ne.s32.totalorder %s64, %s67
      %p73 = scmp.eq.s32.totalorder %s28, 0
      %p74 = por %p72, %p73
      %p75 = scmp.ne.s32.totalorder %s64, %s67
      %p76 = scmp.eq.s32.totalorder %s33, 1
      %p77 = por %p75, %p76
      %p78 = scmp.ne.s32.totalorder %s67, %s68
      %p79 = scmp.eq.s32.totalorder %s33, 0
      %p80 = por %p78, %p79
      %p81 = scmp.ne.s32.totalorder %s67, %s68
      %p82 = scmp.eq.s32.totalorder %s34, 1
      %p83 = por %p81, %p82
      %p85 = scmp.ne.s32.totalorder %s68, %s84
      %p86 = scmp.eq.s32.totalorder %s34, 0
      %p87 = por %p85, %p86
      %s88 = ssub.s32 %s28, %s35
      %p89 = scmp.eq.s32.totalorder %s88, 0
      %s91 = sadd.s32 %s90, 1
      %s92 = scalar_select %p89, %s90, %s91
      %p95 = pneg %p89
      %p96 = scmp.eq.s32.totalorder %s28, 1
      %p97 = por %p95, %p96
      %p98 = scmp.ne.s32.totalorder %s90, %s93
      %p99 = scmp.eq.s32.totalorder %s28, 0
      %p100 = por %p98, %p99
      %p101 = scmp.ne.s32.totalorder %s90, %s93
      %p102 = scmp.eq.s32.totalorder %s33, 1
      %p103 = por %p101, %p102
      %p104 = scmp.ne.s32.totalorder %s93, %s94
      %p105 = scmp.eq.s32.totalorder %s33, 0
      %p106 = por %p104, %p105
      %p107 = scmp.ne.s32.totalorder %s93, %s94
      %p108 = scmp.eq.s32.totalorder %s34, 1
      %p109 = por %p107, %p108
      %p111 = scmp.ne.s32.totalorder %s94, %s110
      %p112 = scmp.eq.s32.totalorder %s34, 0
      %p113 = por %p111, %p112
      %s115 = sadd.s32 %s114, 1
      %p118 = scmp.eq.s32.totalorder %s28, 1
      %p119 = scmp.ne.s32.totalorder %s114, %s116
      %p120 = scmp.eq.s32.totalorder %s28, 0
      %p121 = por %p119, %p120
      %p122 = scmp.ne.s32.totalorder %s114, %s116
      %p123 = scmp.eq.s32.totalorder %s33, 1
      %p124 = por %p122, %p123
      %p125 = scmp.ne.s32.totalorder %s116, %s117
      %p126 = scmp.eq.s32.totalorder %s33, 0
      %p127 = por %p125, %p126
      %p128 = scmp.ne.s32.totalorder %s116, %s117
      %p129 = scmp.eq.s32.totalorder %s34, 1
      %p130 = por %p128, %p129
      %p132 = scmp.ne.s32.totalorder %s117, %s131
      %p133 = scmp.eq.s32.totalorder %s34, 0
      %p134 = por %p132, %p133
      %s136 = sadd.s32 %s135, 1
      %p139 = scmp.eq.s32.totalorder %s28, 1
      %p140 = scmp.ne.s32.totalorder %s135, %s137
      %p141 = scmp.eq.s32.totalorder %s28, 0
      %p142 = por %p140, %p141
      %p143 = scmp.ne.s32.totalorder %s135, %s137
      %p144 = scmp.eq.s32.totalorder %s33, 1
      %p145 = por %p143, %p144
      %p146 = scmp.ne.s32.totalorder %s137, %s138
      %p147 = scmp.eq.s32.totalorder %s33, 0
      %p148 = por %p146, %p147
      %p149 = scmp.ne.s32.totalorder %s137, %s138
      %p150 = scmp.eq.s32.totalorder %s34, 1
      %p151 = por %p149, %p150
      %p153 = scmp.ne.s32.totalorder %s138, %s152
      %p154 = scmp.eq.s32.totalorder %s34, 0
      %p155 = por %p153, %p154
      %s157 = sadd.s32 %s156, 1
      %p160 = scmp.eq.s32.totalorder %s28, 1
      %p161 = scmp.ne.s32.totalorder %s156, %s158
      %p162 = scmp.eq.s32.totalorder %s28, 0
      %p163 = por %p161, %p162
      %p164 = scmp.ne.s32.totalorder %s156, %s158
      %p165 = scmp.eq.s32.totalorder %s33, 1
      %p166 = por %p164, %p165
      %p167 = scmp.ne.s32.totalorder %s158, %s159
      %p168 = scmp.eq.s32.totalorder %s33, 0
      %p169 = por %p167, %p168
      %p170 = scmp.ne.s32.totalorder %s158, %s159
      %p171 = scmp.eq.s32.totalorder %s34, 1
      %p172 = por %p170, %p171
      %p174 = scmp.ne.s32.totalorder %s159, %s173
      %p175 = scmp.eq.s32.totalorder %s34, 0
      %p176 = por %p174, %p175
      %s178 = sadd.s32 %s177, 1
      %p181 = scmp.eq.s32.totalorder %s28, 1
      %p182 = scmp.ne.s32.totalorder %s177, %s179
      %p183 = scmp.eq.s32.totalorder %s28, 0
      %p184 = por %p182, %p183
      %p185 = scmp.ne.s32.totalorder %s177, %s179
      %p186 = scmp.eq.s32.totalorder %s33, 1
      %p187 = por %p185, %p186
      %p188 = scmp.ne.s32.totalorder %s179, %s180
      %p189 = scmp.eq.s32.totalorder %s33, 0
      %p190 = por %p188, %p189
      %p191 = scmp.ne.s32.totalorder %s179, %s180
      %p192 = scmp.eq.s32.totalorder %s34, 1
      %p193 = por %p191, %p192
      %p195 = scmp.ne.s32.totalorder %s180, %s194
      %p196 = scmp.eq.s32.totalorder %s34, 0
      %p197 = por %p195, %p196
      %s199 = sadd.s32 %s198, 1
      %p202 = scmp.eq.s32.totalorder %s28, 1
      %p203 = scmp.ne.s32.totalorder %s198, %s200
      %p204 = scmp.eq.s32.totalorder %s28, 0
      %p205 = por %p203, %p204
      %p206 = scmp.ne.s32.totalorder %s198, %s200
      %p207 = scmp.eq.s32.totalorder %s33, 1
      %p208 = por %p206, %p207
      %p209 = scmp.ne.s32.totalorder %s200, %s201
      %p210 = scmp.eq.s32.totalorder %s33, 0
      %p211 = por %p209, %p210
      %p212 = scmp.ne.s32.totalorder %s200, %s201
      %p213 = scmp.eq.s32.totalorder %s34, 1
      %p214 = por %p212, %p213
      %p216 = scmp.ne.s32.totalorder %s201, %s215
      %p217 = scmp.eq.s32.totalorder %s34, 0
      %p218 = por %p216, %p217
      %s220 = sadd.s32 %s219, 1
      %p223 = scmp.eq.s32.totalorder %s28, 1
      %p224 = scmp.ne.s32.totalorder %s219, %s221
      %p225 = scmp.eq.s32.totalorder %s28, 0
      %p226 = por %p224, %p225
      %p227 = scmp.ne.s32.totalorder %s219, %s221
      %p228 = scmp.eq.s32.totalorder %s33, 1
      %p229 = por %p227, %p228
      %p230 = scmp.ne.s32.totalorder %s221, %s222
      %p231 = scmp.eq.s32.totalorder %s33, 0
      %p232 = por %p230, %p231
      %p233 = scmp.ne.s32.totalorder %s221, %s222
      %p234 = scmp.eq.s32.totalorder %s34, 1
      %p235 = por %p233, %p234
      %p237 = scmp.ne.s32.totalorder %s222, %s236
      %p238 = scmp.eq.s32.totalorder %s34, 0
      %p239 = por %p237, %p238
      %s240 = ssub.s32 %s28, %s35
      %p241 = scmp.eq.s32.totalorder %s240, 0
      %s243 = sadd.s32 %s242, 1
      %s244 = scalar_select %p241, %s242, %s243
      %p247 = pneg %p241
      %p248 = scmp.eq.s32.totalorder %s28, 1
      %p249 = por %p247, %p248
      %p250 = scmp.ne.s32.totalorder %s242, %s245
      %p251 = scmp.eq.s32.totalorder %s28, 0
      %p252 = por %p250, %p251
      %p253 = scmp.ne.s32.totalorder %s242, %s245
      %p254 = scmp.eq.s32.totalorder %s33, 1
      %p255 = por %p253, %p254
      %p256 = scmp.ne.s32.totalorder %s245, %s246
      %p257 = scmp.eq.s32.totalorder %s33, 0
      %p258 = por %p256, %p257
      %p259 = scmp.ne.s32.totalorder %s245, %s246
      %p260 = scmp.eq.s32.totalorder %s34, 1
      %p261 = por %p259, %p260
      %p263 = scmp.ne.s32.totalorder %s246, %s262
      %p264 = scmp.eq.s32.totalorder %s34, 0
      %p265 = por %p263, %p264
      %p266 = scmp.le.s32.totalorder 1, %s28
      %p267 = scmp.lt.s32.totalorder %s28, 3
      %p268 = pnand %p266, %p267
      %p269 = pneg %p268
      // Predicated region
      $region9: #{tpu_custom_call.1} parent=5 // pred_check
        _
      $region10: #{tpu_custom_call.1} parent=5 // pred_check_branch
        %271 = sbr.rel (%p268) target = $region12
      $region11: #{tpu_custom_call.1} parent=5 // pred_region
        %s272 = ssub.s32 %s28, 1
        // Predicated region
        $region13: #{tpu_custom_call.1} parent=11 // pred_check
          %p273 = pneg %p127
        $region14: #{tpu_custom_call.1} parent=11 // pred_check_branch
          %275 = sbr.rel (%p273) target = $region16
        $region15: #{tpu_custom_call.1} parent=11 // pred_region
          %s277 = ssub.s32 1024, 1024
          %278 = vsyncadd [#allocation13], %s277
          %s279 = sshll.u32 [#allocation12], 4
          %s280 = int_to_ptr.vmem [resolvable:$true] %s279
          %285 = dma.hbm_to_vmem [thread:$0]  %s4, 1024, %s280, [#allocation13], 64, 64, 4
        $region16: #{tpu_custom_call.1} parent=11 // pred_fallthru
          _
        // Predicated region
        $region17: #{tpu_custom_call.1} parent=11 // pred_check
          %p286 = pneg %p148
        $region18: #{tpu_custom_call.1} parent=11 // pred_check_branch
          %288 = sbr.rel (%p286) target = $region20
        $region19: #{tpu_custom_call.1} parent=11 // pred_region
          %s290 = ssub.s32 1024, 1024
          %291 = vsyncadd [#allocation13], %s290
          %s292 = sshll.u32 [#allocation14], 4
          %s293 = int_to_ptr.vmem [resolvable:$true] %s292
          %298 = dma.hbm_to_vmem [thread:$0]  %s5, 1024, %s293, [#allocation13], 64, 64, 4
        $region20: #{tpu_custom_call.1} parent=11 // pred_fallthru
          _
        // Predicated region
        $region21: #{tpu_custom_call.1} parent=11 // pred_check
          %p299 = pneg %p169
        $region22: #{tpu_custom_call.1} parent=11 // pred_check_branch
          %301 = sbr.rel (%p299) target = $region24
        $region23: #{tpu_custom_call.1} parent=11 // pred_region
          %s303 = ssub.s32 1024, 1024
          %304 = vsyncadd [#allocation16], %s303
          %s305 = sshll.u32 [#allocation15], 4
          %s306 = int_to_ptr.vmem [resolvable:$true] %s305
          %311 = dma.hbm_to_vmem [thread:$0]  %s6, 1024, %s306, [#allocation16], 64, 64, 4
        $region24: #{tpu_custom_call.1} parent=11 // pred_fallthru
          _
        // Predicated region
        $region25: #{tpu_custom_call.1} parent=11 // pred_check
          %p312 = pneg %p190
        $region26: #{tpu_custom_call.1} parent=11 // pred_check_branch
          %314 = sbr.rel (%p312) target = $region28
        $region27: #{tpu_custom_call.1} parent=11 // pred_region
          _
        $region28: #{tpu_custom_call.1} parent=11 // pred_fallthru
          _
        // Predicated region
        $region29: #{tpu_custom_call.1} parent=11 // pred_check
          %p315 = pneg %p211
        $region30: #{tpu_custom_call.1} parent=11 // pred_check_branch
          %317 = sbr.rel (%p315) target = $region32
        $region31: #{tpu_custom_call.1} parent=11 // pred_region
          _
        $region32: #{tpu_custom_call.1} parent=11 // pred_fallthru
          _
        // Predicated region
        $region33: #{tpu_custom_call.1} parent=11 // pred_check
          %p318 = pneg %p232
        $region34: #{tpu_custom_call.1} parent=11 // pred_check_branch
          %320 = sbr.rel (%p318) target = $region36
        $region35: #{tpu_custom_call.1} parent=11 // pred_region
          _
        $region36: #{tpu_custom_call.1} parent=11 // pred_fallthru
          _
      $region12: #{tpu_custom_call.1} parent=5 // pred_fallthru
        _
      %p321 = scmp.lt.s32.totalorder %s28, 2
      // Predicated region
      $region37: #{tpu_custom_call.1} parent=5 // pred_check
        %p322 = pneg %p321
      $region38: #{tpu_custom_call.1} parent=5 // pred_check_branch
        %324 = sbr.rel (%p322) target = $region40
      $region39: #{tpu_custom_call.1} parent=5 // pred_region
        // Predicated region
        $region41: #{tpu_custom_call.1} parent=39 // pred_check
          %p325 = pneg %p48
        $region42: #{tpu_custom_call.1} parent=39 // pred_check_branch
          %327 = sbr.rel (%p325) target = $region44
        $region43: #{tpu_custom_call.1} parent=39 // pred_region
          %s328 = sand.u32 %s38, 1
          %s329 = scalar_lea.sflag [#allocation7], %s328
          %s330 = sand.u32 %s38, 1
          %s331 = smul.addr %s330, 8
          %s332 = scalar_lea.vmem [#allocation6], %s331
          %s334 = ssub.s32 128, 128
          %335 = vsyncadd %s329, %s334
          %s336 = smul.addr %s28, 2
          %s337 = smul.addr %s336, 64
          %s338 = scalar_lea.hbm %s1, %s337
          %s339 = sshll.u32 %s332, 4
          %s340 = int_to_ptr.vmem [resolvable:$true] %s339
          %345 = dma.hbm_to_vmem [thread:$0]  %s338, 128, %s340, %s329, 64, 64, 4
        $region44: #{tpu_custom_call.1} parent=39 // pred_fallthru
          _
        // Predicated region
        $region45: #{tpu_custom_call.1} parent=39 // pred_check
          %p346 = pneg %p74
        $region46: #{tpu_custom_call.1} parent=39 // pred_check_branch
          %348 = sbr.rel (%p346) target = $region48
        $region47: #{tpu_custom_call.1} parent=39 // pred_region
          %s349 = sand.u32 %s28, 1
          %s350 = scalar_lea.sflag [#allocation10], %s349
          %s351 = sand.u32 %s64, 1
          %s352 = smul.addr %s351, 8
          %s353 = scalar_lea.vmem [#allocation9], %s352
          %s355 = ssub.s32 128, 128
          %356 = vsyncadd %s350, %s355
          %s357 = smul.addr %s28, 2
          %s358 = smul.addr %s357, 64
          %s359 = scalar_lea.hbm %s2, %s358
          %s360 = sshll.u32 %s353, 4
          %s361 = int_to_ptr.vmem [resolvable:$true] %s360
          %366 = dma.hbm_to_vmem [thread:$0]  %s359, 128, %s361, %s350, 64, 64, 4
        $region48: #{tpu_custom_call.1} parent=39 // pred_fallthru
          _
        // Predicated region
        $region49: #{tpu_custom_call.1} parent=39 // pred_check
          %p367 = pneg %p100
        $region50: #{tpu_custom_call.1} parent=39 // pred_check_branch
          %369 = sbr.rel (%p367) target = $region52
        $region51: #{tpu_custom_call.1} parent=39 // pred_region
          %s370 = sand.u32 %s28, 1
          %s371 = scalar_lea.sflag [#allocation10], %s370
          %s372 = sand.u32 %s90, 1
          %s373 = smul.addr %s372, 8
          %s374 = scalar_lea.vmem [#allocation11], %s373
          %s376 = ssub.s32 128, 128
          %377 = vsyncadd %s371, %s376
          %s378 = smul.addr %s28, 2
          %s379 = smul.addr %s378, 64
          %s380 = scalar_lea.hbm %s3, %s379
          %s381 = sshll.u32 %s374, 4
          %s382 = int_to_ptr.vmem [resolvable:$true] %s381
          %387 = dma.hbm_to_vmem [thread:$0]  %s380, 128, %s382, %s371, 64, 64, 4
        $region52: #{tpu_custom_call.1} parent=39 // pred_fallthru
          _
      $region40: #{tpu_custom_call.1} parent=5 // pred_fallthru
        _
      %p388 = scmp.le.s32.totalorder 1, %s28
      %p389 = scmp.lt.s32.totalorder %s28, 3
      %p390 = pnand %p388, %p389
      %p391 = pneg %p390
      // Predicated region
      $region53: #{tpu_custom_call.1} parent=5 // pred_check
        _
      $region54: #{tpu_custom_call.1} parent=5 // pred_check_branch
        %393 = sbr.rel (%p390) target = $region56
      $region55: #{tpu_custom_call.1} parent=5 // pred_region
        %s394 = ssub.s32 %s28, 1
        %s395 = sand.u32 %s41, 1
        %s396 = scalar_lea.sflag [#allocation7], %s395
        %s397 = sand.u32 %s41, 1
        %s398 = smul.addr %s397, 8
        %s399 = scalar_lea.vmem [#allocation6], %s398
        // Predicated region
        $region57: #{tpu_custom_call.1} parent=55 // pred_check
          %p400 = pneg %p54
        $region58: #{tpu_custom_call.1} parent=55 // pred_check_branch
          %402 = sbr.rel (%p400) target = $region60
        $region59: #{tpu_custom_call.1} parent=55 // pred_region
          %403 = dma.done %s396, 128
        $region60: #{tpu_custom_call.1} parent=55 // pred_fallthru
          _
        %s404 = sand.u32 %s33, 1
        %s405 = scalar_lea.sflag [#allocation10], %s404
        %s406 = sand.u32 %s67, 1
        %s407 = smul.addr %s406, 8
        %s408 = scalar_lea.vmem [#allocation9], %s407
        // Predicated region
        $region61: #{tpu_custom_call.1} parent=55 // pred_check
          %p409 = pneg %p80
        $region62: #{tpu_custom_call.1} parent=55 // pred_check_branch
          %411 = sbr.rel (%p409) target = $region64
        $region63: #{tpu_custom_call.1} parent=55 // pred_region
          %412 = dma.done %s405, 128
        $region64: #{tpu_custom_call.1} parent=55 // pred_fallthru
          _
        %s413 = sand.u32 %s33, 1
        %s414 = scalar_lea.sflag [#allocation10], %s413
        %s415 = sand.u32 %s93, 1
        %s416 = smul.addr %s415, 8
        %s417 = scalar_lea.vmem [#allocation11], %s416
        // Predicated region
        $region65: #{tpu_custom_call.1} parent=55 // pred_check
          %p418 = pneg %p106
        $region66: #{tpu_custom_call.1} parent=55 // pred_check_branch
          %420 = sbr.rel (%p418) target = $region68
        $region67: #{tpu_custom_call.1} parent=55 // pred_region
          %421 = dma.done %s414, 128
        $region68: #{tpu_custom_call.1} parent=55 // pred_fallthru
          _
        // Predicated region
        $region69: #{tpu_custom_call.1} parent=55 // pred_check
          %p422 = pneg %p127
        $region70: #{tpu_custom_call.1} parent=55 // pred_check_branch
          %424 = sbr.rel (%p422) target = $region72
        $region71: #{tpu_custom_call.1} parent=55 // pred_region
          %425 = dma.done [#allocation13], 1024
        $region72: #{tpu_custom_call.1} parent=55 // pred_fallthru
          _
        // Predicated region
        $region73: #{tpu_custom_call.1} parent=55 // pred_check
          %p426 = pneg %p148
        $region74: #{tpu_custom_call.1} parent=55 // pred_check_branch
          %428 = sbr.rel (%p426) target = $region76
        $region75: #{tpu_custom_call.1} parent=55 // pred_region
          %429 = dma.done [#allocation13], 1024
        $region76: #{tpu_custom_call.1} parent=55 // pred_fallthru
          _
        // Predicated region
        $region77: #{tpu_custom_call.1} parent=55 // pred_check
          %p430 = pneg %p169
        $region78: #{tpu_custom_call.1} parent=55 // pred_check_branch
          %432 = sbr.rel (%p430) target = $region80
        $region79: #{tpu_custom_call.1} parent=55 // pred_region
          %433 = dma.done [#allocation16], 1024
        $region80: #{tpu_custom_call.1} parent=55 // pred_fallthru
          _
        %s434 = sand.u32 %s41, 1
        %s435 = scalar_lea.sflag [#allocation7], %s434
        %s436 = sand.u32 %s41, 1
        %s437 = smul.addr %s436, 8
        %s438 = scalar_lea.vmem [#allocation6], %s437
        %p439 = pneg %p54
        %p440 = pneg %p51
        %s441 = sand.u32 %s33, 1
        %s442 = scalar_lea.sflag [#allocation10], %s441
        %s443 = sand.u32 %s67, 1
        %s444 = smul.addr %s443, 8
        %s445 = scalar_lea.vmem [#allocation9], %s444
        %p446 = pneg %p80
        %p447 = pneg %p77
        %s448 = sand.u32 %s33, 1
        %s449 = scalar_lea.sflag [#allocation10], %s448
        %s450 = sand.u32 %s93, 1
        %s451 = smul.addr %s450, 8
        %s452 = scalar_lea.vmem [#allocation11], %s451
        %p453 = pneg %p106
        %p454 = pneg %p103
        %p455 = pneg %p127
        %p456 = pneg %p124
        %p457 = pneg %p148
        %p458 = pneg %p145
        %p459 = pneg %p169
        %p460 = pneg %p166
        %p461 = pneg %p190
        %p462 = pneg %p187
        %p463 = pneg %p211
        %p464 = pneg %p208
        %p465 = pneg %p232
        %p466 = pneg %p229
        %p467 = pneg %p258
        %p468 = pneg %p255
        %s469 = sand.u32 %s245, 1
        %s470 = scalar_lea.sflag [#allocation8], %s469
        %s471 = sand.u32 %s245, 1
        %s472 = smul.addr %s471, 16
        %s473 = scalar_lea.vmem [#allocation17], %s472
        %v475 = vld [vmem:[%s399] sm:$0xf]
        %v476 = vld [vmem:[%s399 + $0x4] sm:$0xf]
        %v477 = vld [vmem:[%s408] sm:$0xf]
        %v478 = vld [vmem:[%s408 + $0x4] sm:$0xf]
        %v479 = vld [vmem:[%s417] sm:$0xf]
        %v480 = vld [vmem:[%s417 + $0x4] sm:$0xf]
        %v481 = vld [vmem:[#allocation12] sm:$0xf]
        %v482 = vld [vmem:[#allocation12 + $0x4] sm:$0xf]
        %v483 = vld [vmem:[#allocation12 + $0x8] sm:$0xf]
        %v484 = vld [vmem:[#allocation12 + $0xc] sm:$0xf]
        %v485 = vld [vmem:[#allocation12 + $0x10] sm:$0xf]
        %v486 = vld [vmem:[#allocation12 + $0x14] sm:$0xf]
        %v487 = vld [vmem:[#allocation12 + $0x18] sm:$0xf]
        %v488 = vld [vmem:[#allocation12 + $0x1c] sm:$0xf]
        %v489 = vld [vmem:[#allocation12 + $0x20] sm:$0xf]
        %v490 = vld [vmem:[#allocation12 + $0x24] sm:$0xf]
        %v491 = vld [vmem:[#allocation12 + $0x28] sm:$0xf]
        %v492 = vld [vmem:[#allocation12 + $0x2c] sm:$0xf]
        %v493 = vld [vmem:[#allocation12 + $0x30] sm:$0xf]
        %v494 = vld [vmem:[#allocation12 + $0x34] sm:$0xf]
        %v495 = vld [vmem:[#allocation12 + $0x38] sm:$0xf]
        %v496 = vld [vmem:[#allocation12 + $0x3c] sm:$0xf]
        %v497 = vld [vmem:[%s7] sm:$0x1]
        %v499 = vlaneseq
        %v500 = vshrl.u32 %v499, 7
        %v501 = vsub.s32 0, %v500
        %v502 = vrot.slane %v497, %v501
        %v506 = vunpack.c.l.b16 %v475
        %v507 = vunpack.c.l.b16 %v476
        %v508 = vpack.c.b16 %v507, %v506
        %v526 = vunpack.c.l.b16 %v481
        %v527 = vunpack.c.l.b16 %v482
        %v528 = vunpack.c.l.b16 %v483
        %v529 = vunpack.c.l.b16 %v484
        %v530 = vunpack.c.l.b16 %v485
        %v531 = vunpack.c.l.b16 %v486
        %v532 = vunpack.c.l.b16 %v487
        %v533 = vunpack.c.l.b16 %v488
        %v534 = vunpack.c.l.b16 %v489
        %v535 = vunpack.c.l.b16 %v490
        %v536 = vunpack.c.l.b16 %v491
        %v537 = vunpack.c.l.b16 %v492
        %v538 = vunpack.c.l.b16 %v493
        %v539 = vunpack.c.l.b16 %v494
        %v540 = vunpack.c.l.b16 %v495
        %v541 = vunpack.c.l.b16 %v496
        %v542 = vpack.c.b16 %v527, %v526
        %v543 = vpack.c.b16 %v529, %v528
        %v544 = vpack.c.b16 %v531, %v530
        %v545 = vpack.c.b16 %v533, %v532
        %v546 = vpack.c.b16 %v535, %v534
        %v547 = vpack.c.b16 %v537, %v536
        %v548 = vpack.c.b16 %v539, %v538
        %v549 = vpack.c.b16 %v541, %v540
        %558 = vmatprep.subr.bf16.mxu0 0
        %559 = vmatpush1.bf16.msra.mxu0 %v549
        %560 = vmatprep.subr.bf16.mxu0 0
        %561 = vmatpush1.bf16.msra.mxu0 %v548
        %562 = vmatprep.subr.bf16.mxu0 0
        %563 = vmatpush1.bf16.msra.mxu0 %v547
        %564 = vmatprep.subr.bf16.mxu0 0
        %565 = vmatpush1.bf16.msra.mxu0 %v546
        %566 = vmatprep.subr.bf16.mxu0 0
        %567 = vmatpush1.bf16.msra.mxu0 %v545
        %568 = vmatprep.subr.bf16.mxu0 0
        %569 = vmatpush1.bf16.msra.mxu0 %v544
        %570 = vmatprep.subr.bf16.mxu0 0
        %571 = vmatpush1.bf16.msra.mxu0 %v543
        %572 = vmatprep.subr.bf16.mxu0 0
        %573 = vmatpush1.bf16.msra.mxu0 %v542
        %574 = vmatprep.subr.bf16.mxu0 0
        %575 = vmatpush2.bf16.msra.mxu0 0
        %576 = vmatprep.subr.bf16.mxu0 0
        %577 = vmatpush2.bf16.msra.mxu0 0
        %578 = vmatprep.subr.bf16.mxu0 0
        %579 = vmatpush2.bf16.msra.mxu0 0
        %580 = vmatprep.subr.bf16.mxu0 0
        %581 = vmatpush2.bf16.msra.mxu0 0
        %582 = vmatprep.subr.bf16.mxu0 0
        %583 = vmatpush2.bf16.msra.mxu0 0
        %584 = vmatprep.subr.bf16.mxu0 0
        %585 = vmatpush2.bf16.msra.mxu0 0
        %586 = vmatprep.subr.bf16.mxu0 0
        %587 = vmatpush2.bf16.msra.mxu0 0
        %588 = vmatprep.subr.bf16.mxu0 0
        %589 = vmatpush2.bf16.msra.mxu0 0
        %590 = vmatprep.mubr.bf16.mxu0 0
        %591 = vmatmul.mubr.bf16.gmra.mxu0 %v508
        %v592 = vpop.f32.mrf.mxu0
        %v593 = vadd.f32 %v502, %v592
        %v594 = vpop.f32.mrf.mxu0
        %v595 = vpop.f32.mrf.mxu0
        %v596 = vadd.f32 %v502, %v595
        %v597 = vpop.f32.mrf.mxu0
        %598 = vdwg.mxu0
        %v599 = vld [vmem:[#allocation14] sm:$0xf]
        %v600 = vld [vmem:[#allocation14 + $0x4] sm:$0xf]
        %v601 = vld [vmem:[#allocation14 + $0x8] sm:$0xf]
        %v602 = vld [vmem:[#allocation14 + $0xc] sm:$0xf]
        %v603 = vld [vmem:[#allocation14 + $0x10] sm:$0xf]
        %v604 = vld [vmem:[#allocation14 + $0x14] sm:$0xf]
        %v605 = vld [vmem:[#allocation14 + $0x18] sm:$0xf]
        %v606 = vld [vmem:[#allocation14 + $0x1c] sm:$0xf]
        %v607 = vld [vmem:[#allocation14 + $0x20] sm:$0xf]
        %v608 = vld [vmem:[#allocation14 + $0x24] sm:$0xf]
        %v609 = vld [vmem:[#allocation14 + $0x28] sm:$0xf]
        %v610 = vld [vmem:[#allocation14 + $0x2c] sm:$0xf]
        %v611 = vld [vmem:[#allocation14 + $0x30] sm:$0xf]
        %v612 = vld [vmem:[#allocation14 + $0x34] sm:$0xf]
        %v613 = vld [vmem:[#allocation14 + $0x38] sm:$0xf]
        %v614 = vld [vmem:[#allocation14 + $0x3c] sm:$0xf]
        %v615 = vld [vmem:[%s8] sm:$0x1]
        %v617 = vlaneseq
        %v618 = vshrl.u32 %v617, 7
        %v619 = vsub.s32 0, %v618
        %v620 = vrot.slane %v615, %v619
        %v624 = vunpack.c.l.b16 %v477
        %v625 = vunpack.c.l.b16 %v478
        %v626 = vpack.c.b16 %v625, %v624
        %v644 = vunpack.c.l.b16 %v599
        %v645 = vunpack.c.l.b16 %v600
        %v646 = vunpack.c.l.b16 %v601
        %v647 = vunpack.c.l.b16 %v602
        %v648 = vunpack.c.l.b16 %v603
        %v649 = vunpack.c.l.b16 %v604
        %v650 = vunpack.c.l.b16 %v605
        %v651 = vunpack.c.l.b16 %v606
        %v652 = vunpack.c.l.b16 %v607
        %v653 = vunpack.c.l.b16 %v608
        %v654 = vunpack.c.l.b16 %v609
        %v655 = vunpack.c.l.b16 %v610
        %v656 = vunpack.c.l.b16 %v611
        %v657 = vunpack.c.l.b16 %v612
        %v658 = vunpack.c.l.b16 %v613
        %v659 = vunpack.c.l.b16 %v614
        %v660 = vpack.c.b16 %v645, %v644
        %v661 = vpack.c.b16 %v647, %v646
        %v662 = vpack.c.b16 %v649, %v648
        %v663 = vpack.c.b16 %v651, %v650
        %v664 = vpack.c.b16 %v653, %v652
        %v665 = vpack.c.b16 %v655, %v654
        %v666 = vpack.c.b16 %v657, %v656
        %v667 = vpack.c.b16 %v659, %v658
        %676 = vmatprep.subr.bf16.mxu0 0
        %677 = vmatpush1.bf16.msra.mxu0 %v667
        %678 = vmatprep.subr.bf16.mxu0 0
        %679 = vmatpush1.bf16.msra.mxu0 %v666
        %680 = vmatprep.subr.bf16.mxu0 0
        %681 = vmatpush1.bf16.msra.mxu0 %v665
        %682 = vmatprep.subr.bf16.mxu0 0
        %683 = vmatpush1.bf16.msra.mxu0 %v664
        %684 = vmatprep.subr.bf16.mxu0 0
        %685 = vmatpush1.bf16.msra.mxu0 %v663
        %686 = vmatprep.subr.bf16.mxu0 0
        %687 = vmatpush1.bf16.msra.mxu0 %v662
        %688 = vmatprep.subr.bf16.mxu0 0
        %689 = vmatpush1.bf16.msra.mxu0 %v661
        %690 = vmatprep.subr.bf16.mxu0 0
        %691 = vmatpush1.bf16.msra.mxu0 %v660
        %692 = vmatprep.subr.bf16.mxu0 0
        %693 = vmatpush2.bf16.msra.mxu0 0
        %694 = vmatprep.subr.bf16.mxu0 0
        %695 = vmatpush2.bf16.msra.mxu0 0
        %696 = vmatprep.subr.bf16.mxu0 0
        %697 = vmatpush2.bf16.msra.mxu0 0
        %698 = vmatprep.subr.bf16.mxu0 0
        %699 = vmatpush2.bf16.msra.mxu0 0
        %700 = vmatprep.subr.bf16.mxu0 0
        %701 = vmatpush2.bf16.msra.mxu0 0
        %702 = vmatprep.subr.bf16.mxu0 0
        %703 = vmatpush2.bf16.msra.mxu0 0
        %704 = vmatprep.subr.bf16.mxu0 0
        %705 = vmatpush2.bf16.msra.mxu0 0
        %706 = vmatprep.subr.bf16.mxu0 0
        %707 = vmatpush2.bf16.msra.mxu0 0
        %708 = vmatprep.mubr.bf16.mxu0 0
        %709 = vmatmul.mubr.bf16.gmra.mxu0 %v626
        %v710 = vpop.f32.mrf.mxu0
        %v711 = vadd.f32 %v620, %v710
        %v712 = vpop.f32.mrf.mxu0
        %v713 = vpop.f32.mrf.mxu0
        %v714 = vadd.f32 %v620, %v713
        %v715 = vpop.f32.mrf.mxu0
        %716 = vdwg.mxu0
        %v717 = vld [vmem:[#allocation15] sm:$0xf]
        %v718 = vld [vmem:[#allocation15 + $0x4] sm:$0xf]
        %v719 = vld [vmem:[#allocation15 + $0x8] sm:$0xf]
        %v720 = vld [vmem:[#allocation15 + $0xc] sm:$0xf]
        %v721 = vld [vmem:[#allocation15 + $0x10] sm:$0xf]
        %v722 = vld [vmem:[#allocation15 + $0x14] sm:$0xf]
        %v723 = vld [vmem:[#allocation15 + $0x18] sm:$0xf]
        %v724 = vld [vmem:[#allocation15 + $0x1c] sm:$0xf]
        %v725 = vld [vmem:[#allocation15 + $0x20] sm:$0xf]
        %v726 = vld [vmem:[#allocation15 + $0x24] sm:$0xf]
        %v727 = vld [vmem:[#allocation15 + $0x28] sm:$0xf]
        %v728 = vld [vmem:[#allocation15 + $0x2c] sm:$0xf]
        %v729 = vld [vmem:[#allocation15 + $0x30] sm:$0xf]
        %v730 = vld [vmem:[#allocation15 + $0x34] sm:$0xf]
        %v731 = vld [vmem:[#allocation15 + $0x38] sm:$0xf]
        %v732 = vld [vmem:[#allocation15 + $0x3c] sm:$0xf]
        %v733 = vld [vmem:[%s9] sm:$0x1]
        %v735 = vlaneseq
        %v736 = vshrl.u32 %v735, 7
        %v737 = vsub.s32 0, %v736
        %v738 = vrot.slane %v733, %v737
        %v742 = vunpack.c.l.b16 %v479
        %v743 = vunpack.c.l.b16 %v480
        %v744 = vpack.c.b16 %v743, %v742
        %v762 = vunpack.c.l.b16 %v717
        %v763 = vunpack.c.l.b16 %v718
        %v764 = vunpack.c.l.b16 %v719
        %v765 = vunpack.c.l.b16 %v720
        %v766 = vunpack.c.l.b16 %v721
        %v767 = vunpack.c.l.b16 %v722
        %v768 = vunpack.c.l.b16 %v723
        %v769 = vunpack.c.l.b16 %v724
        %v770 = vunpack.c.l.b16 %v725
        %v771 = vunpack.c.l.b16 %v726
        %v772 = vunpack.c.l.b16 %v727
        %v773 = vunpack.c.l.b16 %v728
        %v774 = vunpack.c.l.b16 %v729
        %v775 = vunpack.c.l.b16 %v730
        %v776 = vunpack.c.l.b16 %v731
        %v777 = vunpack.c.l.b16 %v732
        %v778 = vpack.c.b16 %v763, %v762
        %v779 = vpack.c.b16 %v765, %v764
        %v780 = vpack.c.b16 %v767, %v766
        %v781 = vpack.c.b16 %v769, %v768
        %v782 = vpack.c.b16 %v771, %v770
        %v783 = vpack.c.b16 %v773, %v772
        %v784 = vpack.c.b16 %v775, %v774
        %v785 = vpack.c.b16 %v777, %v776
        %794 = vmatprep.subr.bf16.mxu0 0
        %795 = vmatpush1.bf16.msra.mxu0 %v785
        %796 = vmatprep.subr.bf16.mxu0 0
        %797 = vmatpush1.bf16.msra.mxu0 %v784
        %798 = vmatprep.subr.bf16.mxu0 0
        %799 = vmatpush1.bf16.msra.mxu0 %v783
        %800 = vmatprep.subr.bf16.mxu0 0
        %801 = vmatpush1.bf16.msra.mxu0 %v782
        %802 = vmatprep.subr.bf16.mxu0 0
        %803 = vmatpush1.bf16.msra.mxu0 %v781
        %804 = vmatprep.subr.bf16.mxu0 0
        %805 = vmatpush1.bf16.msra.mxu0 %v780
        %806 = vmatprep.subr.bf16.mxu0 0
        %807 = vmatpush1.bf16.msra.mxu0 %v779
        %808 = vmatprep.subr.bf16.mxu0 0
        %809 = vmatpush1.bf16.msra.mxu0 %v778
        %810 = vmatprep.subr.bf16.mxu0 0
        %811 = vmatpush2.bf16.msra.mxu0 0
        %812 = vmatprep.subr.bf16.mxu0 0
        %813 = vmatpush2.bf16.msra.mxu0 0
        %814 = vmatprep.subr.bf16.mxu0 0
        %815 = vmatpush2.bf16.msra.mxu0 0
        %816 = vmatprep.subr.bf16.mxu0 0
        %817 = vmatpush2.bf16.msra.mxu0 0
        %818 = vmatprep.subr.bf16.mxu0 0
        %819 = vmatpush2.bf16.msra.mxu0 0
        %820 = vmatprep.subr.bf16.mxu0 0
        %821 = vmatpush2.bf16.msra.mxu0 0
        %822 = vmatprep.subr.bf16.mxu0 0
        %823 = vmatpush2.bf16.msra.mxu0 0
        %824 = vmatprep.subr.bf16.mxu0 0
        %825 = vmatpush2.bf16.msra.mxu0 0
        %826 = vmatprep.mubr.bf16.mxu0 0
        %827 = vmatmul.mubr.bf16.gmra.mxu0 %v744
        %v828 = vpop.f32.mrf.mxu0
        %v829 = vadd.f32 %v738, %v828
        %v830 = vpop.f32.mrf.mxu0
        %v831 = vpop.f32.mrf.mxu0
        %v832 = vadd.f32 %v738, %v831
        %v833 = vpop.f32.mrf.mxu0
        %834 = vdwg.mxu0
        %v835 = vmul.f32 %v593, 0.17677669
        %v836 = vmul.f32 %v596, 0.17677669
        %v837 = vpack.c.bf16 %v836, %v835
        %v838 = vpack.c.bf16 %v714, %v711
        %v840 = vunpack.c.l.b16 %v838
        %v841 = vunpack.c.h.b16 %v838
        %v842 = vpack.c.b16 %v840, %v840
        %v843 = vpack.c.b16 %v841, %v841
        %846 = vst [vmem:[#allocation2] sm:$0xf] %v842
        %847 = vst [vmem:[#allocation2 + $0x4] sm:$0xf] %v843
        %v848 = vpack.c.bf16 %v832, %v829
        %v850 = vunpack.c.l.b16 %v848
        %v851 = vunpack.c.h.b16 %v848
        %v852 = vpack.c.b16 %v850, %v850
        %v853 = vpack.c.b16 %v851, %v851
        %856 = vst [vmem:[#allocation3] sm:$0xf] %v852
        %857 = vst [vmem:[#allocation3 + $0x4] sm:$0xf] %v853
        %v858 = vld [vmem:[#allocation2] sm:$0xf]
        %v859 = vld [vmem:[#allocation2 + $0x4] sm:$0xf]
        %v860 = vld [vmem:[#allocation3] sm:$0xf]
        %v861 = vld [vmem:[#allocation3 + $0x4] sm:$0xf]
        %v864 = vunpack.c.l.b16 %v858
        %v865 = vunpack.c.l.b16 %v859
        %v866 = vpack.c.b16 %v865, %v864
        %868 = vmatprep.subr.bf16.mxu0 0
        %869 = vmatpush1.bf16.xpose.msra.mxu0 0
        %870 = vmatprep.subr.bf16.mxu0 0
        %871 = vmatpush1.bf16.xpose.msra.mxu0 0
        %872 = vmatprep.subr.bf16.mxu0 0
        %873 = vmatpush1.bf16.xpose.msra.mxu0 0
        %874 = vmatprep.subr.bf16.mxu0 0
        %875 = vmatpush1.bf16.xpose.msra.mxu0 0
        %876 = vmatprep.subr.bf16.mxu0 0
        %877 = vmatpush1.bf16.xpose.msra.mxu0 0
        %878 = vmatprep.subr.bf16.mxu0 0
        %879 = vmatpush1.bf16.xpose.msra.mxu0 0
        %880 = vmatprep.subr.bf16.mxu0 0
        %881 = vmatpush1.bf16.xpose.msra.mxu0 0
        %882 = vmatprep.subr.bf16.mxu0 0
        %883 = vmatpush1.bf16.xpose.msra.mxu0 %v866
        %884 = vmatprep.subr.bf16.mxu0 0
        %885 = vmatpush2.bf16.xpose.msra.mxu0 0
        %886 = vmatprep.subr.bf16.mxu0 0
        %887 = vmatpush2.bf16.xpose.msra.mxu0 0
        %888 = vmatprep.subr.bf16.mxu0 0
        %889 = vmatpush2.bf16.xpose.msra.mxu0 0
        %890 = vmatprep.subr.bf16.mxu0 0
        %891 = vmatpush2.bf16.xpose.msra.mxu0 0
        %892 = vmatprep.subr.bf16.mxu0 0
        %893 = vmatpush2.bf16.xpose.msra.mxu0 0
        %894 = vmatprep.subr.bf16.mxu0 0
        %895 = vmatpush2.bf16.xpose.msra.mxu0 0
        %896 = vmatprep.subr.bf16.mxu0 0
        %897 = vmatpush2.bf16.xpose.msra.mxu0 0
        %898 = vmatprep.subr.bf16.mxu0 0
        %899 = vmatpush2.bf16.xpose.msra.mxu0 0
        %900 = vmatprep.mubr.bf16.mxu0 0
        %901 = vmatmul.mubr.bf16.gmra.mxu0 %v837
        %v902 = vpop.f32.mrf.mxu0
        %v903 = vadd.f32 0.0, %v902
        %v904 = vpop.f32.mrf.mxu0
        %v905 = vpop.f32.mrf.mxu0
        %v906 = vadd.f32 0.0, %v905
        %v907 = vpop.f32.mrf.mxu0
        %908 = vdwg.mxu0
        %v909 = vlaneseq
        %v910 = vand.u32 %v909, 127
        %vm911 = vcmp.lt.s32.totalorder %v910, 8
        %v912 = vsel %vm911, %v903, -1e+30
        %v913 = vsel %vm911, %v906, -1e+30
        %vm914 = vcmask 130048
        %v915 = vsel %vm914, %v912, -inf
        %916 = vmax.xlane.f32.xlu0 %v915
        %v917 = vpop.xlane.xlu0 %916
        %v918 = vsel %vm914, %v913, -inf
        %919 = vmax.xlane.f32.xlu0 %v918
        %v920 = vpop.xlane.xlu0 %919
        %v921 = vsub.f32 -inf, %v917
        %v922 = vsub.f32 -inf, %v920
        %v923 = vmul.f32 %v921, 1.442695
        %v924 = vpow.pop %v923
        %v925 = vmul.f32 %v922, 1.442695
        %v926 = vpow.pop %v925
        %v927 = vsub.f32 %v912, %v917
        %v928 = vsub.f32 %v913, %v920
        %v929 = vmul.f32 %v927, 1.442695
        %v930 = vpow.pop %v929
        %v931 = vmul.f32 %v928, 1.442695
        %v932 = vpow.pop %v931
        %v933 = vmul.f32 %v924, 0.0
        %v934 = vmul.f32 %v926, 0.0
        %v935 = vsel %vm914, %v930, 0.0
        %936 = vadd.xlane.f32.xlu0 %v935
        %v937 = vpop.xlane.xlu0 %936
        %v938 = vsel %vm914, %v932, 0.0
        %939 = vadd.xlane.f32.xlu0 %v938
        %v940 = vpop.xlane.xlu0 %939
        %v941 = vadd.f32 %v933, %v937
        %v942 = vadd.f32 %v934, %v940
        %v943 = vpack.c.bf16 %v932, %v930
        %v946 = vunpack.c.l.b16 %v860
        %v947 = vunpack.c.l.b16 %v861
        %v948 = vpack.c.b16 %v947, %v946
        %v951 = vsel %vm914, %v943, 0
        %953 = vmatprep.subr.bf16.mxu0 0
        %954 = vmatpush1.bf16.msra.mxu0 0
        %955 = vmatprep.subr.bf16.mxu0 0
        %956 = vmatpush1.bf16.msra.mxu0 0
        %957 = vmatprep.subr.bf16.mxu0 0
        %958 = vmatpush1.bf16.msra.mxu0 0
        %959 = vmatprep.subr.bf16.mxu0 0
        %960 = vmatpush1.bf16.msra.mxu0 0
        %961 = vmatprep.subr.bf16.mxu0 0
        %962 = vmatpush1.bf16.msra.mxu0 0
        %963 = vmatprep.subr.bf16.mxu0 0
        %964 = vmatpush1.bf16.msra.mxu0 0
        %965 = vmatprep.subr.bf16.mxu0 0
        %966 = vmatpush1.bf16.msra.mxu0 0
        %967 = vmatprep.subr.bf16.mxu0 0
        %968 = vmatpush1.bf16.msra.mxu0 %v948
        %969 = vmatprep.subr.bf16.mxu0 0
        %970 = vmatpush2.bf16.msra.mxu0 0
        %971 = vmatprep.subr.bf16.mxu0 0
        %972 = vmatpush2.bf16.msra.mxu0 0
        %973 = vmatprep.subr.bf16.mxu0 0
        %974 = vmatpush2.bf16.msra.mxu0 0
        %975 = vmatprep.subr.bf16.mxu0 0
        %976 = vmatpush2.bf16.msra.mxu0 0
        %977 = vmatprep.subr.bf16.mxu0 0
        %978 = vmatpush2.bf16.msra.mxu0 0
        %979 = vmatprep.subr.bf16.mxu0 0
        %980 = vmatpush2.bf16.msra.mxu0 0
        %981 = vmatprep.subr.bf16.mxu0 0
        %982 = vmatpush2.bf16.msra.mxu0 0
        %983 = vmatprep.subr.bf16.mxu0 0
        %984 = vmatpush2.bf16.msra.mxu0 0
        %985 = vmatprep.mubr.bf16.mxu0 0
        %986 = vmatmul.mubr.bf16.gmra.mxu0 %v951
        %v987 = vpop.f32.mrf.mxu0
        %v988 = vadd.f32 0.0, %v987
        %v989 = vpop.f32.mrf.mxu0
        %v990 = vpop.f32.mrf.mxu0
        %v991 = vadd.f32 0.0, %v990
        %v992 = vpop.f32.mrf.mxu0
        %993 = vdwg.mxu0
        %v994 = vadd.f32 %v933, %v988
        %v995 = vadd.f32 %v934, %v991
        %v996 = vrcp.pop %v941
        %v997 = vrcp.pop %v942
        %v998 = vmul.f32 %v994, %v996
        %v999 = vmul.f32 %v995, %v997
        %1000 = vst [vmem:[%s473] sm:$0xff] %v998
        %1001 = vst [vmem:[%s473 + $0x8] sm:$0xff] %v999
        %s1002 = sand.u32 %s245, 1
        %s1003 = scalar_lea.sflag [#allocation8], %s1002
        %s1004 = sand.u32 %s245, 1
        %s1005 = smul.addr %s1004, 16
        %s1006 = scalar_lea.vmem [#allocation17], %s1005
        // Predicated region
        $region81: #{tpu_custom_call.1} parent=55 // pred_check
          %p1007 = pneg %p255
        $region82: #{tpu_custom_call.1} parent=55 // pred_check_branch
          %1009 = sbr.rel (%p1007) target = $region84
        $region83: #{tpu_custom_call.1} parent=55 // pred_region
          %s1011 = ssub.s32 256, 256
          %1012 = vsyncadd %s1003, %s1011
          %s1013 = smul.addr %s33, 2
          %s1014 = smul.addr %s1013, 128
          %s1015 = scalar_lea.hbm %s10, %s1014
          %s1016 = sshll.u32 %s1006, 4
          %s1017 = int_to_ptr.vmem [resolvable:$true] %s1016
          %1022 = dma.vmem_to_hbm [thread:$0]  %s1017, 256, %s1015, %s1003, 128, 128, 8
        $region84: #{tpu_custom_call.1} parent=55 // pred_fallthru
          _
      $region56: #{tpu_custom_call.1} parent=5 // pred_fallthru
        _
      %p1023 = scmp.le.s32.totalorder 2, %s28
      // Predicated region
      $region85: #{tpu_custom_call.1} parent=5 // pred_check
        %p1024 = pneg %p1023
      $region86: #{tpu_custom_call.1} parent=5 // pred_check_branch
        %1026 = sbr.rel (%p1024) target = $region88
      $region87: #{tpu_custom_call.1} parent=5 // pred_region
        %s1027 = ssub.s32 %s28, 2
        // Predicated region
        $region89: #{tpu_custom_call.1} parent=87 // pred_check
          %p1028 = pneg %p261
        $region90: #{tpu_custom_call.1} parent=87 // pred_check_branch
          %1030 = sbr.rel (%p1028) target = $region92
        $region91: #{tpu_custom_call.1} parent=87 // pred_region
          %s1031 = sand.u32 %s246, 1
          %s1032 = scalar_lea.sflag [#allocation8], %s1031
          %s1033 = sand.u32 %s246, 1
          %s1034 = smul.addr %s1033, 16
          %s1035 = scalar_lea.vmem [#allocation17], %s1034
          %1036 = dma.done %s1032, 256
        $region92: #{tpu_custom_call.1} parent=87 // pred_fallthru
          _
      $region88: #{tpu_custom_call.1} parent=5 // pred_fallthru
        _
    $region6: #{tpu_custom_call.1} parent=1 // loop_footer
      %s32 = sadd.s32 1, %s28
    $region7: #{tpu_custom_call.1} parent=1 // loop_footer_branch
      %27 = sbr.rel target = $region3
    $region8: #{tpu_custom_call.1} parent=1 // loop_exit
      _
    %1037 = vsyncpa [#allocation7], 1
    %s1038 = scalar_lea.sflag [#allocation7], 1
    %1039 = vsyncpa %s1038, 1
    %1040 = vsyncpa [#allocation10], 1
    %s1041 = scalar_lea.sflag [#allocation10], 1
    %1042 = vsyncpa %s1041, 1
    %1043 = vsyncpa [#allocation13], 1
    %1044 = vsyncpa [#allocation16], 1
    %1045 = vsyncpa [#allocation8], 1
    %s1046 = scalar_lea.sflag [#allocation8], 1
    %1047 = vsyncpa %s1046, 1

// kernel: tpu_custom_call.1
$region0: #{tpu_custom_call.1}
  #allocation0 [shape = 'u32[]', space=smem, size = 0x4, offset = 0x4, fixed_abs, tag = 'smem constant byte address 0x4 - core index']
  #allocation1 [shape = 'u32[144,128]{1,0:T(1,128)}', space=vmem, size = 0x12000, scoped, tag = 'internal scratch']
  #allocation2 [shape = 'bf16[1,16,128]{2,1,0:T(8,128)(2,1)}', space=vmem, size = 0x1000, scoped, tag = 'scratch operand']
  #allocation3 [shape = 'bf16[1,16,128]{2,1,0:T(8,128)(2,1)}', space=vmem, size = 0x1000, scoped, tag = 'scratch operand']
  #allocation4 [shape = 's32[1]{0}', space=sflag, size = 0x4, scoped, tag = 'scoped memory for tpu_custom_call.1']
  #allocation5 [shape = 's32[1]{0:T(128)S(6)}', space=smem, size = 0x200, scoped, tag = 'prefetched SMEM operand 0']
  %s0 = inlined_call_operand.<no memory space> [shape: s32[1], index: 0, kind: input, shape index: {}]
  %s1 = inlined_call_operand.hbm [shape: bf16[2,16,128], index: 1, kind: input, shape index: {}]
  %s2 = inlined_call_operand.hbm [shape: bf16[2,16,128], index: 2, kind: input, shape index: {}]
  %s3 = inlined_call_operand.hbm [shape: bf16[2,16,128], index: 3, kind: input, shape index: {}]
  %s4 = inlined_call_operand.hbm [shape: bf16[128,128], index: 4, kind: input, shape index: {}]
  %s5 = inlined_call_operand.hbm [shape: bf16[128,128], index: 5, kind: input, shape index: {}]
  %s6 = inlined_call_operand.hbm [shape: bf16[128,128], index: 6, kind: input, shape index: {}]
  %s7 = inlined_call_operand.vmem [shape: f32[1,128], index: 7, kind: input, shape index: {}]
  %s8 = inlined_call_operand.vmem [shape: f32[1,128], index: 8, kind: input, shape index: {}]
  %s9 = inlined_call_operand.vmem [shape: f32[1,128], index: 9, kind: input, shape index: {}]
  %s10 = inlined_call_operand.hbm [shape: f32[2,16,128], index: 10, kind: output, shape index: {}]
  %s11 = sld [smem:[#allocation0]]
  $region93: #{tpu_custom_call.1} parent=0
    _
  %s13 = ssub.s32 1, %s11
  %s14 = scalar_select 0, %s13, %s11
  %15 = sst [smem:[#allocation5]] %s0
  $region1: #{tpu_custom_call.1} parent=0
    #allocation6 [shape = 'u8[8192]{0}', space=vmem, size = 0x2000, scoped, tag = 'input window, operand 1']
    #allocation7 [shape = 's32[2]{0}', space=sflag, size = 0x8, scoped, tag = 'scoped memory for tpu_custom_call.1']
    #allocation8 [shape = 's32[2]{0}', space=sflag, size = 0x8, scoped, tag = 'scoped memory for tpu_custom_call.1']
    #allocation9 [shape = 'u8[8192]{0}', space=vmem, size = 0x2000, scoped, tag = 'input window, operand 2']
    #allocation10 [shape = 's32[2]{0}', space=sflag, size = 0x8, scoped, tag = 'scoped memory for tpu_custom_call.1']
    #allocation11 [shape = 'u8[8192]{0}', space=vmem, size = 0x2000, scoped, tag = 'input window, operand 3']
    #allocation12 [shape = 'u8[32768]{0}', space=vmem, size = 0x8000, scoped, tag = 'input window, operand 4, single buffered']
    #allocation13 [shape = 's32[1]{0}', space=sflag, size = 0x4, scoped, tag = 'scoped memory for tpu_custom_call.1']
    #allocation14 [shape = 'u8[32768]{0}', space=vmem, size = 0x8000, scoped, tag = 'input window, operand 5, single buffered']
    #allocation15 [shape = 'u8[32768]{0}', space=vmem, size = 0x8000, scoped, tag = 'input window, operand 6, single buffered']
    #allocation16 [shape = 's32[1]{0}', space=sflag, size = 0x4, scoped, tag = 'scoped memory for tpu_custom_call.1']
    #allocation17 [shape = 'u8[16384]{0}', space=vmem, size = 0x4000, scoped, tag = 'output window, operand 0']
    %16 = vsyncpa [#allocation7], 0
    %s17 = scalar_lea.sflag [#allocation7], 1
    %18 = vsyncpa %s17, 0
    %19 = vsyncpa [#allocation10], 0
    %s20 = scalar_lea.sflag [#allocation10], 1
    %21 = vsyncpa %s20, 0
    %22 = vsyncpa [#allocation13], 0
    %23 = vsyncpa [#allocation16], 0
    %24 = vsyncpa [#allocation8], 0
    %s25 = scalar_lea.sflag [#allocation8], 1
    %26 = vsyncpa %s25, 0
    loop: start=0, step=1, limit=4
    $region2: #{tpu_custom_call.1} parent=1 // loop_pre_header
      _
    $region3: #{tpu_custom_call.1} parent=1 // loop_header
      %s28 = sphi 0, %s32
      %p29 = scmp.ge.s32.totalorder %s28, 4
      %s38 = sphi 0, %s40
      %s41 = sphi 0, %s38
      %s42 = sphi 0, %s41
      %s58 = sphi 0, %s42
      %s64 = sphi 0, %s66
      %s67 = sphi 0, %s64
      %s68 = sphi 0, %s67
      %s84 = sphi 0, %s68
      %s90 = sphi 0, %s92
      %s93 = sphi 0, %s90
      %s94 = sphi 0, %s93
      %s110 = sphi 0, %s94
      %s114 = sphi 0, %s114
      %s116 = sphi 0, %s114
      %s117 = sphi 0, %s116
      %s131 = sphi 0, %s117
      %s135 = sphi 0, %s135
      %s137 = sphi 0, %s135
      %s138 = sphi 0, %s137
      %s152 = sphi 0, %s138
      %s156 = sphi 0, %s156
      %s158 = sphi 0, %s156
      %s159 = sphi 0, %s158
      %s173 = sphi 0, %s159
      %s177 = sphi 0, %s177
      %s179 = sphi 0, %s177
      %s180 = sphi 0, %s179
      %s194 = sphi 0, %s180
      %s198 = sphi 0, %s198
      %s200 = sphi 0, %s198
      %s201 = sphi 0, %s200
      %s215 = sphi 0, %s201
      %s219 = sphi 0, %s219
      %s221 = sphi 0, %s219
      %s222 = sphi 0, %s221
      %s236 = sphi 0, %s222
      %s242 = sphi 0, %s244
      %s245 = sphi 0, %s242
      %s246 = sphi 0, %s245
      %s262 = sphi 0, %s246
    $region4: #{tpu_custom_call.1} parent=1 // loop_header_branch
      %31 = sbr.rel (%p29) target = $region8
    $region5: #{tpu_custom_call.1} parent=1 // loop_body
      %s33 = ssub.s32 %s28, 1
      %s34 = ssub.s32 %s28, 2
      %s35 = sadd.s32 %s28, 1
      %s36 = ssub.s32 %s28, %s35
      %p37 = scmp.eq.s32.totalorder %s36, 0
      %s39 = sadd.s32 %s38, 1
      %s40 = scalar_select %p37, %s38, %s39
      %p43 = pneg %p37
      %p44 = scmp.eq.s32.totalorder %s28, 1
      %p45 = por %p43, %p44
      %p46 = scmp.ne.s32.totalorder %s38, %s41
      %p47 = scmp.eq.s32.totalorder %s28, 0
      %p48 = por %p46, %p47
      %p49 = scmp.ne.s32.totalorder %s38, %s41
      %p50 = scmp.eq.s32.totalorder %s33, 1
      %p51 = por %p49, %p50
      %p52 = scmp.ne.s32.totalorder %s41, %s42
      %p53 = scmp.eq.s32.totalorder %s33, 0
      %p54 = por %p52, %p53
      %p55 = scmp.ne.s32.totalorder %s41, %s42
      %p56 = scmp.eq.s32.totalorder %s34, 1
      %p57 = por %p55, %p56
      %p59 = scmp.ne.s32.totalorder %s42, %s58
      %p60 = scmp.eq.s32.totalorder %s34, 0
      %p61 = por %p59, %p60
      %s62 = ssub.s32 %s28, %s35
      %p63 = scmp.eq.s32.totalorder %s62, 0
      %s65 = sadd.s32 %s64, 1
      %s66 = scalar_select %p63, %s64, %s65
      %p69 = pneg %p63
      %p70 = scmp.eq.s32.totalorder %s28, 1
      %p71 = por %p69, %p70
      %p72 = scmp.ne.s32.totalorder %s64, %s67
      %p73 = scmp.eq.s32.totalorder %s28, 0
      %p74 = por %p72, %p73
      %p75 = scmp.ne.s32.totalorder %s64, %s67
      %p76 = scmp.eq.s32.totalorder %s33, 1
      %p77 = por %p75, %p76
      %p78 = scmp.ne.s32.totalorder %s67, %s68
      %p79 = scmp.eq.s32.totalorder %s33, 0
      %p80 = por %p78, %p79
      %p81 = scmp.ne.s32.totalorder %s67, %s68
      %p82 = scmp.eq.s32.totalorder %s34, 1
      %p83 = por %p81, %p82
      %p85 = scmp.ne.s32.totalorder %s68, %s84
      %p86 = scmp.eq.s32.totalorder %s34, 0
      %p87 = por %p85, %p86
      %s88 = ssub.s32 %s28, %s35
      %p89 = scmp.eq.s32.totalorder %s88, 0
      %s91 = sadd.s32 %s90, 1
      %s92 = scalar_select %p89, %s90, %s91
      %p95 = pneg %p89
      %p96 = scmp.eq.s32.totalorder %s28, 1
      %p97 = por %p95, %p96
      %p98 = scmp.ne.s32.totalorder %s90, %s93
      %p99 = scmp.eq.s32.totalorder %s28, 0
      %p100 = por %p98, %p99
      %p101 = scmp.ne.s32.totalorder %s90, %s93
      %p102 = scmp.eq.s32.totalorder %s33, 1
      %p103 = por %p101, %p102
      %p104 = scmp.ne.s32.totalorder %s93, %s94
      %p105 = scmp.eq.s32.totalorder %s33, 0
      %p106 = por %p104, %p105
      %p107 = scmp.ne.s32.totalorder %s93, %s94
      %p108 = scmp.eq.s32.totalorder %s34, 1
      %p109 = por %p107, %p108
      %p111 = scmp.ne.s32.totalorder %s94, %s110
      %p112 = scmp.eq.s32.totalorder %s34, 0
      %p113 = por %p111, %p112
      %s115 = sadd.s32 %s114, 1
      %p118 = scmp.eq.s32.totalorder %s28, 1
      %p119 = scmp.ne.s32.totalorder %s114, %s116
      %p120 = scmp.eq.s32.totalorder %s28, 0
      %p121 = por %p119, %p120
      %p122 = scmp.ne.s32.totalorder %s114, %s116
      %p123 = scmp.eq.s32.totalorder %s33, 1
      %p124 = por %p122, %p123
      %p125 = scmp.ne.s32.totalorder %s116, %s117
      %p126 = scmp.eq.s32.totalorder %s33, 0
      %p127 = por %p125, %p126
      %p128 = scmp.ne.s32.totalorder %s116, %s117
      %p129 = scmp.eq.s32.totalorder %s34, 1
      %p130 = por %p128, %p129
      %p132 = scmp.ne.s32.totalorder %s117, %s131
      %p133 = scmp.eq.s32.totalorder %s34, 0
      %p134 = por %p132, %p133
      %s136 = sadd.s32 %s135, 1
      %p139 = scmp.eq.s32.totalorder %s28, 1
      %p140 = scmp.ne.s32.totalorder %s135, %s137
      %p141 = scmp.eq.s32.totalorder %s28, 0
      %p142 = por %p140, %p141
      %p143 = scmp.ne.s32.totalorder %s135, %s137
      %p144 = scmp.eq.s32.totalorder %s33, 1
      %p145 = por %p143, %p144
      %p146 = scmp.ne.s32.totalorder %s137, %s138
      %p147 = scmp.eq.s32.totalorder %s33, 0
      %p148 = por %p146, %p147
      %p149 = scmp.ne.s32.totalorder %s137, %s138
      %p150 = scmp.eq.s32.totalorder %s34, 1
      %p151 = por %p149, %p150
      %p153 = scmp.ne.s32.totalorder %s138, %s152
      %p154 = scmp.eq.s32.totalorder %s34, 0
      %p155 = por %p153, %p154
      %s157 = sadd.s32 %s156, 1
      %p160 = scmp.eq.s32.totalorder %s28, 1
      %p161 = scmp.ne.s32.totalorder %s156, %s158
      %p162 = scmp.eq.s32.totalorder %s28, 0
      %p163 = por %p161, %p162
      %p164 = scmp.ne.s32.totalorder %s156, %s158
      %p165 = scmp.eq.s32.totalorder %s33, 1
      %p166 = por %p164, %p165
      %p167 = scmp.ne.s32.totalorder %s158, %s159
      %p168 = scmp.eq.s32.totalorder %s33, 0
      %p169 = por %p167, %p168
      %p170 = scmp.ne.s32.totalorder %s158, %s159
      %p171 = scmp.eq.s32.totalorder %s34, 1
      %p172 = por %p170, %p171
      %p174 = scmp.ne.s32.totalorder %s159, %s173
      %p175 = scmp.eq.s32.totalorder %s34, 0
      %p176 = por %p174, %p175
      %s178 = sadd.s32 %s177, 1
      %p181 = scmp.eq.s32.totalorder %s28, 1
      %p182 = scmp.ne.s32.totalorder %s177, %s179
      %p183 = scmp.eq.s32.totalorder %s28, 0
      %p184 = por %p182, %p183
      %p185 = scmp.ne.s32.totalorder %s177, %s179
      %p186 = scmp.eq.s32.totalorder %s33, 1
      %p187 = por %p185, %p186
      %p188 = scmp.ne.s32.totalorder %s179, %s180
      %p189 = scmp.eq.s32.totalorder %s33, 0
      %p190 = por %p188, %p189
      %p191 = scmp.ne.s32.totalorder %s179, %s180
      %p192 = scmp.eq.s32.totalorder %s34, 1
      %p193 = por %p191, %p192
      %p195 = scmp.ne.s32.totalorder %s180, %s194
      %p196 = scmp.eq.s32.totalorder %s34, 0
      %p197 = por %p195, %p196
      %s199 = sadd.s32 %s198, 1
      %p202 = scmp.eq.s32.totalorder %s28, 1
      %p203 = scmp.ne.s32.totalorder %s198, %s200
      %p204 = scmp.eq.s32.totalorder %s28, 0
      %p205 = por %p203, %p204
      %p206 = scmp.ne.s32.totalorder %s198, %s200
      %p207 = scmp.eq.s32.totalorder %s33, 1
      %p208 = por %p206, %p207
      %p209 = scmp.ne.s32.totalorder %s200, %s201
      %p210 = scmp.eq.s32.totalorder %s33, 0
      %p211 = por %p209, %p210
      %p212 = scmp.ne.s32.totalorder %s200, %s201
      %p213 = scmp.eq.s32.totalorder %s34, 1
      %p214 = por %p212, %p213
      %p216 = scmp.ne.s32.totalorder %s201, %s215
      %p217 = scmp.eq.s32.totalorder %s34, 0
      %p218 = por %p216, %p217
      %s220 = sadd.s32 %s219, 1
      %p223 = scmp.eq.s32.totalorder %s28, 1
      %p224 = scmp.ne.s32.totalorder %s219, %s221
      %p225 = scmp.eq.s32.totalorder %s28, 0
      %p226 = por %p224, %p225
      %p227 = scmp.ne.s32.totalorder %s219, %s221
      %p228 = scmp.eq.s32.totalorder %s33, 1
      %p229 = por %p227, %p228
      %p230 = scmp.ne.s32.totalorder %s221, %s222
      %p231 = scmp.eq.s32.totalorder %s33, 0
      %p232 = por %p230, %p231
      %p233 = scmp.ne.s32.totalorder %s221, %s222
      %p234 = scmp.eq.s32.totalorder %s34, 1
      %p235 = por %p233, %p234
      %p237 = scmp.ne.s32.totalorder %s222, %s236
      %p238 = scmp.eq.s32.totalorder %s34, 0
      %p239 = por %p237, %p238
      %s240 = ssub.s32 %s28, %s35
      %p241 = scmp.eq.s32.totalorder %s240, 0
      %s243 = sadd.s32 %s242, 1
      %s244 = scalar_select %p241, %s242, %s243
      %p247 = pneg %p241
      %p248 = scmp.eq.s32.totalorder %s28, 1
      %p249 = por %p247, %p248
      %p250 = scmp.ne.s32.totalorder %s242, %s245
      %p251 = scmp.eq.s32.totalorder %s28, 0
      %p252 = por %p250, %p251
      %p253 = scmp.ne.s32.totalorder %s242, %s245
      %p254 = scmp.eq.s32.totalorder %s33, 1
      %p255 = por %p253, %p254
      %p256 = scmp.ne.s32.totalorder %s245, %s246
      %p257 = scmp.eq.s32.totalorder %s33, 0
      %p258 = por %p256, %p257
      %p259 = scmp.ne.s32.totalorder %s245, %s246
      %p260 = scmp.eq.s32.totalorder %s34, 1
      %p261 = por %p259, %p260
      %p263 = scmp.ne.s32.totalorder %s246, %s262
      %p264 = scmp.eq.s32.totalorder %s34, 0
      %p265 = por %p263, %p264
      %p266 = scmp.le.s32.totalorder 1, %s28
      %p267 = scmp.lt.s32.totalorder %s28, 3
      %p268 = pnand %p266, %p267
      %p269 = pneg %p268
      // Predicated region
      $region9: #{tpu_custom_call.1} parent=5 // pred_check
        _
      $region10: #{tpu_custom_call.1} parent=5 // pred_check_branch
        %271 = sbr.rel (%p268) target = $region12
      $region11: #{tpu_custom_call.1} parent=5 // pred_region
        %s272 = ssub.s32 %s28, 1
        // Predicated region
        $region13: #{tpu_custom_call.1} parent=11 // pred_check
          %p273 = pneg %p127
        $region14: #{tpu_custom_call.1} parent=11 // pred_check_branch
          %275 = sbr.rel (%p273) target = $region16
        $region15: #{tpu_custom_call.1} parent=11 // pred_region
          %s277 = ssub.s32 1024, 1024
          %278 = vsyncadd [#allocation13], %s277
          %s279 = sshll.u32 [#allocation12], 4
          %s280 = int_to_ptr.vmem [resolvable:$true] %s279
          %285 = dma.hbm_to_vmem [thread:$0]  %s4, 1024, %s280, [#allocation13], 64, 64, 4
        $region16: #{tpu_custom_call.1} parent=11 // pred_fallthru
          _
        // Predicated region
        $region17: #{tpu_custom_call.1} parent=11 // pred_check
          %p286 = pneg %p148
        $region18: #{tpu_custom_call.1} parent=11 // pred_check_branch
          %288 = sbr.rel (%p286) target = $region20
        $region19: #{tpu_custom_call.1} parent=11 // pred_region
          %s290 = ssub.s32 1024, 1024
          %291 = vsyncadd [#allocation13], %s290
          %s292 = sshll.u32 [#allocation14], 4
          %s293 = int_to_ptr.vmem [resolvable:$true] %s292
          %298 = dma.hbm_to_vmem [thread:$0]  %s5, 1024, %s293, [#allocation13], 64, 64, 4
        $region20: #{tpu_custom_call.1} parent=11 // pred_fallthru
          _
        // Predicated region
        $region21: #{tpu_custom_call.1} parent=11 // pred_check
          %p299 = pneg %p169
        $region22: #{tpu_custom_call.1} parent=11 // pred_check_branch
          %301 = sbr.rel (%p299) target = $region24
        $region23: #{tpu_custom_call.1} parent=11 // pred_region
          %s303 = ssub.s32 1024, 1024
          %304 = vsyncadd [#allocation16], %s303
          %s305 = sshll.u32 [#allocation15], 4
          %s306 = int_to_ptr.vmem [resolvable:$true] %s305
          %311 = dma.hbm_to_vmem [thread:$0]  %s6, 1024, %s306, [#allocation16], 64, 64, 4
        $region24: #{tpu_custom_call.1} parent=11 // pred_fallthru
          _
        // Predicated region
        $region25: #{tpu_custom_call.1} parent=11 // pred_check
          %p312 = pneg %p190
        $region26: #{tpu_custom_call.1} parent=11 // pred_check_branch
          %314 = sbr.rel (%p312) target = $region28
        $region27: #{tpu_custom_call.1} parent=11 // pred_region
          _
        $region28: #{tpu_custom_call.1} parent=11 // pred_fallthru
          _
        // Predicated region
        $region29: #{tpu_custom_call.1} parent=11 // pred_check
          %p315 = pneg %p211
        $region30: #{tpu_custom_call.1} parent=11 // pred_check_branch
          %317 = sbr.rel (%p315) target = $region32
        $region31: #{tpu_custom_call.1} parent=11 // pred_region
          _
        $region32: #{tpu_custom_call.1} parent=11 // pred_fallthru
          _
        // Predicated region
        $region33: #{tpu_custom_call.1} parent=11 // pred_check
          %p318 = pneg %p232
        $region34: #{tpu_custom_call.1} parent=11 // pred_check_branch
          %320 = sbr.rel (%p318) target = $region36
        $region35: #{tpu_custom_call.1} parent=11 // pred_region
          _
        $region36: #{tpu_custom_call.1} parent=11 // pred_fallthru
          _
      $region12: #{tpu_custom_call.1} parent=5 // pred_fallthru
        _
      %p321 = scmp.lt.s32.totalorder %s28, 2
      // Predicated region
      $region37: #{tpu_custom_call.1} parent=5 // pred_check
        %p322 = pneg %p321
      $region38: #{tpu_custom_call.1} parent=5 // pred_check_branch
        %324 = sbr.rel (%p322) target = $region40
      $region39: #{tpu_custom_call.1} parent=5 // pred_region
        // Predicated region
        $region41: #{tpu_custom_call.1} parent=39 // pred_check
          %p325 = pneg %p48
        $region42: #{tpu_custom_call.1} parent=39 // pred_check_branch
          %327 = sbr.rel (%p325) target = $region44
        $region43: #{tpu_custom_call.1} parent=39 // pred_region
          %s328 = sand.u32 %s38, 1
          %s329 = scalar_lea.sflag [#allocation7], %s328
          %s330 = sand.u32 %s38, 1
          %s331 = smul.addr %s330, 8
          %s332 = scalar_lea.vmem [#allocation6], %s331
          %s334 = ssub.s32 128, 128
          %335 = vsyncadd %s329, %s334
          %s336 = smul.addr %s28, 2
          %s337 = smul.addr %s336, 64
          %s338 = scalar_lea.hbm %s1, %s337
          %s339 = sshll.u32 %s332, 4
          %s340 = int_to_ptr.vmem [resolvable:$true] %s339
          %345 = dma.hbm_to_vmem [thread:$0]  %s338, 128, %s340, %s329, 64, 64, 4
        $region44: #{tpu_custom_call.1} parent=39 // pred_fallthru
          _
        // Predicated region
        $region45: #{tpu_custom_call.1} parent=39 // pred_check
          %p346 = pneg %p74
        $region46: #{tpu_custom_call.1} parent=39 // pred_check_branch
          %348 = sbr.rel (%p346) target = $region48
        $region47: #{tpu_custom_call.1} parent=39 // pred_region
          %s349 = sand.u32 %s28, 1
          %s350 = scalar_lea.sflag [#allocation10], %s349
          %s351 = sand.u32 %s64, 1
          %s352 = smul.addr %s351, 8
          %s353 = scalar_lea.vmem [#allocation9], %s352
          %s355 = ssub.s32 128, 128
          %356 = vsyncadd %s350, %s355
          %s357 = smul.addr %s28, 2
          %s358 = smul.addr %s357, 64
          %s359 = scalar_lea.hbm %s2, %s358
          %s360 = sshll.u32 %s353, 4
          %s361 = int_to_ptr.vmem [resolvable:$true] %s360
          %366 = dma.hbm_to_vmem [thread:$0]  %s359, 128, %s361, %s350, 64, 64, 4
        $region48: #{tpu_custom_call.1} parent=39 // pred_fallthru
          _
        // Predicated region
        $region49: #{tpu_custom_call.1} parent=39 // pred_check
          %p367 = pneg %p100
        $region50: #{tpu_custom_call.1} parent=39 // pred_check_branch
          %369 = sbr.rel (%p367) target = $region52
        $region51: #{tpu_custom_call.1} parent=39 // pred_region
          %s370 = sand.u32 %s28, 1
          %s371 = scalar_lea.sflag [#allocation10], %s370
          %s372 = sand.u32 %s90, 1
          %s373 = smul.addr %s372, 8
          %s374 = scalar_lea.vmem [#allocation11], %s373
          %s376 = ssub.s32 128, 128
          %377 = vsyncadd %s371, %s376
          %s378 = smul.addr %s28, 2
          %s379 = smul.addr %s378, 64
          %s380 = scalar_lea.hbm %s3, %s379
          %s381 = sshll.u32 %s374, 4
          %s382 = int_to_ptr.vmem [resolvable:$true] %s381
          %387 = dma.hbm_to_vmem [thread:$0]  %s380, 128, %s382, %s371, 64, 64, 4
        $region52: #{tpu_custom_call.1} parent=39 // pred_fallthru
          _
      $region40: #{tpu_custom_call.1} parent=5 // pred_fallthru
        _
      %p388 = scmp.le.s32.totalorder 1, %s28
      %p389 = scmp.lt.s32.totalorder %s28, 3
      %p390 = pnand %p388, %p389
      %p391 = pneg %p390
      // Predicated region
      $region53: #{tpu_custom_call.1} parent=5 // pred_check
        _
      $region54: #{tpu_custom_call.1} parent=5 // pred_check_branch
        %393 = sbr.rel (%p390) target = $region56
      $region55: #{tpu_custom_call.1} parent=5 // pred_region
        %s394 = ssub.s32 %s28, 1
        %s395 = sand.u32 %s41, 1
        %s396 = scalar_lea.sflag [#allocation7], %s395
        %s397 = sand.u32 %s41, 1
        %s398 = smul.addr %s397, 8
        %s399 = scalar_lea.vmem [#allocation6], %s398
        // Predicated region
        $region57: #{tpu_custom_call.1} parent=55 // pred_check
          %p400 = pneg %p54
        $region58: #{tpu_custom_call.1} parent=55 // pred_check_branch
          %402 = sbr.rel (%p400) target = $region60
        $region59: #{tpu_custom_call.1} parent=55 // pred_region
          %403 = dma.done %s396, 128
        $region60: #{tpu_custom_call.1} parent=55 // pred_fallthru
          _
        %s404 = sand.u32 %s33, 1
        %s405 = scalar_lea.sflag [#allocation10], %s404
        %s406 = sand.u32 %s67, 1
        %s407 = smul.addr %s406, 8
        %s408 = scalar_lea.vmem [#allocation9], %s407
        // Predicated region
        $region61: #{tpu_custom_call.1} parent=55 // pred_check
          %p409 = pneg %p80
        $region62: #{tpu_custom_call.1} parent=55 // pred_check_branch
          %411 = sbr.rel (%p409) target = $region64
        $region63: #{tpu_custom_call.1} parent=55 // pred_region
          %412 = dma.done %s405, 128
        $region64: #{tpu_custom_call.1} parent=55 // pred_fallthru
          _
        %s413 = sand.u32 %s33, 1
        %s414 = scalar_lea.sflag [#allocation10], %s413
        %s415 = sand.u32 %s93, 1
        %s416 = smul.addr %s415, 8
        %s417 = scalar_lea.vmem [#allocation11], %s416
        // Predicated region
        $region65: #{tpu_custom_call.1} parent=55 // pred_check
          %p418 = pneg %p106
        $region66: #{tpu_custom_call.1} parent=55 // pred_check_branch
          %420 = sbr.rel (%p418) target = $region68
        $region67: #{tpu_custom_call.1} parent=55 // pred_region
          %421 = dma.done %s414, 128
        $region68: #{tpu_custom_call.1} parent=55 // pred_fallthru
          _
        // Predicated region
        $region69: #{tpu_custom_call.1} parent=55 // pred_check
          %p422 = pneg %p127
        $region70: #{tpu_custom_call.1} parent=55 // pred_check_branch
          %424 = sbr.rel (%p422) target = $region72
        $region71: #{tpu_custom_call.1} parent=55 // pred_region
          %425 = dma.done [#allocation13], 1024
        $region72: #{tpu_custom_call.1} parent=55 // pred_fallthru
          _
        // Predicated region
        $region73: #{tpu_custom_call.1} parent=55 // pred_check
          %p426 = pneg %p148
        $region74: #{tpu_custom_call.1} parent=55 // pred_check_branch
          %428 = sbr.rel (%p426) target = $region76
        $region75: #{tpu_custom_call.1} parent=55 // pred_region
          %429 = dma.done [#allocation13], 1024
        $region76: #{tpu_custom_call.1} parent=55 // pred_fallthru
          _
        // Predicated region
        $region77: #{tpu_custom_call.1} parent=55 // pred_check
          %p430 = pneg %p169
        $region78: #{tpu_custom_call.1} parent=55 // pred_check_branch
          %432 = sbr.rel (%p430) target = $region80
        $region79: #{tpu_custom_call.1} parent=55 // pred_region
          %433 = dma.done [#allocation16], 1024
        $region80: #{tpu_custom_call.1} parent=55 // pred_fallthru
          _
        %s434 = sand.u32 %s41, 1
        %s435 = scalar_lea.sflag [#allocation7], %s434
        %s436 = sand.u32 %s41, 1
        %s437 = smul.addr %s436, 8
        %s438 = scalar_lea.vmem [#allocation6], %s437
        %p439 = pneg %p54
        %p440 = pneg %p51
        %s441 = sand.u32 %s33, 1
        %s442 = scalar_lea.sflag [#allocation10], %s441
        %s443 = sand.u32 %s67, 1
        %s444 = smul.addr %s443, 8
        %s445 = scalar_lea.vmem [#allocation9], %s444
        %p446 = pneg %p80
        %p447 = pneg %p77
        %s448 = sand.u32 %s33, 1
        %s449 = scalar_lea.sflag [#allocation10], %s448
        %s450 = sand.u32 %s93, 1
        %s451 = smul.addr %s450, 8
        %s452 = scalar_lea.vmem [#allocation11], %s451
        %p453 = pneg %p106
        %p454 = pneg %p103
        %p455 = pneg %p127
        %p456 = pneg %p124
        %p457 = pneg %p148
        %p458 = pneg %p145
        %p459 = pneg %p169
        %p460 = pneg %p166
        %p461 = pneg %p190
        %p462 = pneg %p187
        %p463 = pneg %p211
        %p464 = pneg %p208
        %p465 = pneg %p232
        %p466 = pneg %p229
        %p467 = pneg %p258
        %p468 = pneg %p255
        %s469 = sand.u32 %s245, 1
        %s470 = scalar_lea.sflag [#allocation8], %s469
        %s471 = sand.u32 %s245, 1
        %s472 = smul.addr %s471, 16
        %s473 = scalar_lea.vmem [#allocation17], %s472
        %v475 = vld [vmem:[%s399] sm:$0xf]
        %v476 = vld [vmem:[%s399 + $0x4] sm:$0xf]
        %v477 = vld [vmem:[%s408] sm:$0xf]
        %v478 = vld [vmem:[%s408 + $0x4] sm:$0xf]
        %v479 = vld [vmem:[%s417] sm:$0xf]
        %v480 = vld [vmem:[%s417 + $0x4] sm:$0xf]
        %v481 = vld [vmem:[#allocation12] sm:$0xf]
        %v482 = vld [vmem:[#allocation12 + $0x4] sm:$0xf]
        %v483 = vld [vmem:[#allocation12 + $0x8] sm:$0xf]
        %v484 = vld [vmem:[#allocation12 + $0xc] sm:$0xf]
        %v485 = vld [vmem:[#allocation12 + $0x10] sm:$0xf]
        %v486 = vld [vmem:[#allocation12 + $0x14] sm:$0xf]
        %v487 = vld [vmem:[#allocation12 + $0x18] sm:$0xf]
        %v488 = vld [vmem:[#allocation12 + $0x1c] sm:$0xf]
        %v489 = vld [vmem:[#allocation12 + $0x20] sm:$0xf]
        %v490 = vld [vmem:[#allocation12 + $0x24] sm:$0xf]
        %v491 = vld [vmem:[#allocation12 + $0x28] sm:$0xf]
        %v492 = vld [vmem:[#allocation12 + $0x2c] sm:$0xf]
        %v493 = vld [vmem:[#allocation12 + $0x30] sm:$0xf]
        %v494 = vld [vmem:[#allocation12 + $0x34] sm:$0xf]
        %v495 = vld [vmem:[#allocation12 + $0x38] sm:$0xf]
        %v496 = vld [vmem:[#allocation12 + $0x3c] sm:$0xf]
        %v497 = vld [vmem:[%s7] sm:$0x1]
        %v499 = vlaneseq
        %v500 = vshrl.u32 %v499, 7
        %v501 = vsub.s32 0, %v500
        %v502 = vrot.slane %v497, %v501
        %v506 = vunpack.c.l.b16 %v475
        %v507 = vunpack.c.l.b16 %v476
        %v508 = vpack.c.b16 %v507, %v506
        %v526 = vunpack.c.l.b16 %v481
        %v527 = vunpack.c.l.b16 %v482
        %v528 = vunpack.c.l.b16 %v483
        %v529 = vunpack.c.l.b16 %v484
        %v530 = vunpack.c.l.b16 %v485
        %v531 = vunpack.c.l.b16 %v486
        %v532 = vunpack.c.l.b16 %v487
        %v533 = vunpack.c.l.b16 %v488
        %v534 = vunpack.c.l.b16 %v489
        %v535 = vunpack.c.l.b16 %v490
        %v536 = vunpack.c.l.b16 %v491
        %v537 = vunpack.c.l.b16 %v492
        %v538 = vunpack.c.l.b16 %v493
        %v539 = vunpack.c.l.b16 %v494
        %v540 = vunpack.c.l.b16 %v495
        %v541 = vunpack.c.l.b16 %v496
        %v542 = vpack.c.b16 %v527, %v526
        %v543 = vpack.c.b16 %v529, %v528
        %v544 = vpack.c.b16 %v531, %v530
        %v545 = vpack.c.b16 %v533, %v532
        %v546 = vpack.c.b16 %v535, %v534
        %v547 = vpack.c.b16 %v537, %v536
        %v548 = vpack.c.b16 %v539, %v538
        %v549 = vpack.c.b16 %v541, %v540
        %558 = vmatprep.subr.bf16.mxu0 0
        %559 = vmatpush1.bf16.msra.mxu0 %v549
        %560 = vmatprep.subr.bf16.mxu0 0
        %561 = vmatpush1.bf16.msra.mxu0 %v548
        %562 = vmatprep.subr.bf16.mxu0 0
        %563 = vmatpush1.bf16.msra.mxu0 %v547
        %564 = vmatprep.subr.bf16.mxu0 0
        %565 = vmatpush1.bf16.msra.mxu0 %v546
        %566 = vmatprep.subr.bf16.mxu0 0
        %567 = vmatpush1.bf16.msra.mxu0 %v545
        %568 = vmatprep.subr.bf16.mxu0 0
        %569 = vmatpush1.bf16.msra.mxu0 %v544
        %570 = vmatprep.subr.bf16.mxu0 0
        %571 = vmatpush1.bf16.msra.mxu0 %v543
        %572 = vmatprep.subr.bf16.mxu0 0
        %573 = vmatpush1.bf16.msra.mxu0 %v542
        %574 = vmatprep.subr.bf16.mxu0 0
        %575 = vmatpush2.bf16.msra.mxu0 0
        %576 = vmatprep.subr.bf16.mxu0 0
        %577 = vmatpush2.bf16.msra.mxu0 0
        %578 = vmatprep.subr.bf16.mxu0 0
        %579 = vmatpush2.bf16.msra.mxu0 0
        %580 = vmatprep.subr.bf16.mxu0 0
        %581 = vmatpush2.bf16.msra.mxu0 0
        %582 = vmatprep.subr.bf16.mxu0 0
        %583 = vmatpush2.bf16.msra.mxu0 0
        %584 = vmatprep.subr.bf16.mxu0 0
        %585 = vmatpush2.bf16.msra.mxu0 0
        %586 = vmatprep.subr.bf16.mxu0 0
        %587 = vmatpush2.bf16.msra.mxu0 0
        %588 = vmatprep.subr.bf16.mxu0 0
        %589 = vmatpush2.bf16.msra.mxu0 0
        %590 = vmatprep.mubr.bf16.mxu0 0
        %591 = vmatmul.mubr.bf16.gmra.mxu0 %v508
        %v592 = vpop.f32.mrf.mxu0
        %v593 = vadd.f32 %v502, %v592
        %v594 = vpop.f32.mrf.mxu0
        %v595 = vpop.f32.mrf.mxu0
        %v596 = vadd.f32 %v502, %v595
        %v597 = vpop.f32.mrf.mxu0
        %598 = vdwg.mxu0
        %v599 = vld [vmem:[#allocation14] sm:$0xf]
        %v600 = vld [vmem:[#allocation14 + $0x4] sm:$0xf]
        %v601 = vld [vmem:[#allocation14 + $0x8] sm:$0xf]
        %v602 = vld [vmem:[#allocation14 + $0xc] sm:$0xf]
        %v603 = vld [vmem:[#allocation14 + $0x10] sm:$0xf]
        %v604 = vld [vmem:[#allocation14 + $0x14] sm:$0xf]
        %v605 = vld [vmem:[#allocation14 + $0x18] sm:$0xf]
        %v606 = vld [vmem:[#allocation14 + $0x1c] sm:$0xf]
        %v607 = vld [vmem:[#allocation14 + $0x20] sm:$0xf]
        %v608 = vld [vmem:[#allocation14 + $0x24] sm:$0xf]
        %v609 = vld [vmem:[#allocation14 + $0x28] sm:$0xf]
        %v610 = vld [vmem:[#allocation14 + $0x2c] sm:$0xf]
        %v611 = vld [vmem:[#allocation14 + $0x30] sm:$0xf]
        %v612 = vld [vmem:[#allocation14 + $0x34] sm:$0xf]
        %v613 = vld [vmem:[#allocation14 + $0x38] sm:$0xf]
        %v614 = vld [vmem:[#allocation14 + $0x3c] sm:$0xf]
        %v615 = vld [vmem:[%s8] sm:$0x1]
        %v617 = vlaneseq
        %v618 = vshrl.u32 %v617, 7
        %v619 = vsub.s32 0, %v618
        %v620 = vrot.slane %v615, %v619
        %v624 = vunpack.c.l.b16 %v477
        %v625 = vunpack.c.l.b16 %v478
        %v626 = vpack.c.b16 %v625, %v624
        %v644 = vunpack.c.l.b16 %v599
        %v645 = vunpack.c.l.b16 %v600
        %v646 = vunpack.c.l.b16 %v601
        %v647 = vunpack.c.l.b16 %v602
        %v648 = vunpack.c.l.b16 %v603
        %v649 = vunpack.c.l.b16 %v604
        %v650 = vunpack.c.l.b16 %v605
        %v651 = vunpack.c.l.b16 %v606
        %v652 = vunpack.c.l.b16 %v607
        %v653 = vunpack.c.l.b16 %v608
        %v654 = vunpack.c.l.b16 %v609
        %v655 = vunpack.c.l.b16 %v610
        %v656 = vunpack.c.l.b16 %v611
        %v657 = vunpack.c.l.b16 %v612
        %v658 = vunpack.c.l.b16 %v613
        %v659 = vunpack.c.l.b16 %v614
        %v660 = vpack.c.b16 %v645, %v644
        %v661 = vpack.c.b16 %v647, %v646
        %v662 = vpack.c.b16 %v649, %v648
        %v663 = vpack.c.b16 %v651, %v650
        %v664 = vpack.c.b16 %v653, %v652
        %v665 = vpack.c.b16 %v655, %v654
        %v666 = vpack.c.b16 %v657, %v656
        %v667 = vpack.c.b16 %v659, %v658
        %676 = vmatprep.subr.bf16.mxu0 0
        %677 = vmatpush1.bf16.msra.mxu0 %v667
        %678 = vmatprep.subr.bf16.mxu0 0
        %679 = vmatpush1.bf16.msra.mxu0 %v666
        %680 = vmatprep.subr.bf16.mxu0 0
        %681 = vmatpush1.bf16.msra.mxu0 %v665
        %682 = vmatprep.subr.bf16.mxu0 0
        %683 = vmatpush1.bf16.msra.mxu0 %v664
        %684 = vmatprep.subr.bf16.mxu0 0
        %685 = vmatpush1.bf16.msra.mxu0 %v663
        %686 = vmatprep.subr.bf16.mxu0 0
        %687 = vmatpush1.bf16.msra.mxu0 %v662
        %688 = vmatprep.subr.bf16.mxu0 0
        %689 = vmatpush1.bf16.msra.mxu0 %v661
        %690 = vmatprep.subr.bf16.mxu0 0
        %691 = vmatpush1.bf16.msra.mxu0 %v660
        %692 = vmatprep.subr.bf16.mxu0 0
        %693 = vmatpush2.bf16.msra.mxu0 0
        %694 = vmatprep.subr.bf16.mxu0 0
        %695 = vmatpush2.bf16.msra.mxu0 0
        %696 = vmatprep.subr.bf16.mxu0 0
        %697 = vmatpush2.bf16.msra.mxu0 0
        %698 = vmatprep.subr.bf16.mxu0 0
        %699 = vmatpush2.bf16.msra.mxu0 0
        %700 = vmatprep.subr.bf16.mxu0 0
        %701 = vmatpush2.bf16.msra.mxu0 0
        %702 = vmatprep.subr.bf16.mxu0 0
        %703 = vmatpush2.bf16.msra.mxu0 0
        %704 = vmatprep.subr.bf16.mxu0 0
        %705 = vmatpush2.bf16.msra.mxu0 0
        %706 = vmatprep.subr.bf16.mxu0 0
        %707 = vmatpush2.bf16.msra.mxu0 0
        %708 = vmatprep.mubr.bf16.mxu0 0
        %709 = vmatmul.mubr.bf16.gmra.mxu0 %v626
        %v710 = vpop.f32.mrf.mxu0
        %v711 = vadd.f32 %v620, %v710
        %v712 = vpop.f32.mrf.mxu0
        %v713 = vpop.f32.mrf.mxu0
        %v714 = vadd.f32 %v620, %v713
        %v715 = vpop.f32.mrf.mxu0
        %716 = vdwg.mxu0
        %v717 = vld [vmem:[#allocation15] sm:$0xf]
        %v718 = vld [vmem:[#allocation15 + $0x4] sm:$0xf]
        %v719 = vld [vmem:[#allocation15 + $0x8] sm:$0xf]
        %v720 = vld [vmem:[#allocation15 + $0xc] sm:$0xf]
        %v721 = vld [vmem:[#allocation15 + $0x10] sm:$0xf]
        %v722 = vld [vmem:[#allocation15 + $0x14] sm:$0xf]
        %v723 = vld [vmem:[#allocation15 + $0x18] sm:$0xf]
        %v724 = vld [vmem:[#allocation15 + $0x1c] sm:$0xf]
        %v725 = vld [vmem:[#allocation15 + $0x20] sm:$0xf]
        %v726 = vld [vmem:[#allocation15 + $0x24] sm:$0xf]
        %v727 = vld [vmem:[#allocation15 + $0x28] sm:$0xf]
        %v728 = vld [vmem:[#allocation15 + $0x2c] sm:$0xf]
        %v729 = vld [vmem:[#allocation15 + $0x30] sm:$0xf]
        %v730 = vld [vmem:[#allocation15 + $0x34] sm:$0xf]
        %v731 = vld [vmem:[#allocation15 + $0x38] sm:$0xf]
        %v732 = vld [vmem:[#allocation15 + $0x3c] sm:$0xf]
        %v733 = vld [vmem:[%s9] sm:$0x1]
        %v735 = vlaneseq
        %v736 = vshrl.u32 %v735, 7
        %v737 = vsub.s32 0, %v736
        %v738 = vrot.slane %v733, %v737
        %v742 = vunpack.c.l.b16 %v479
        %v743 = vunpack.c.l.b16 %v480
        %v744 = vpack.c.b16 %v743, %v742
        %v762 = vunpack.c.l.b16 %v717
        %v763 = vunpack.c.l.b16 %v718
        %v764 = vunpack.c.l.b16 %v719
        %v765 = vunpack.c.l.b16 %v720
        %v766 = vunpack.c.l.b16 %v721
        %v767 = vunpack.c.l.b16 %v722
        %v768 = vunpack.c.l.b16 %v723
        %v769 = vunpack.c.l.b16 %v724
        %v770 = vunpack.c.l.b16 %v725
        %v771 = vunpack.c.l.b16 %v726
        %v772 = vunpack.c.l.b16 %v727
        %v773 = vunpack.c.l.b16 %v728
        %v774 = vunpack.c.l.b16 %v729
        %v775 = vunpack.c.l.b16 %v730
        %v776 = vunpack.c.l.b16 %v731
        %v777 = vunpack.c.l.b16 %v732
        %v778 = vpack.c.b16 %v763, %v762
        %v779 = vpack.c.b16 %v765, %v764
        %v780 = vpack.c.b16 %v767, %v766
        %v781 = vpack.c.b16 %v769, %v768
        %v782 = vpack.c.b16 %v771, %v770
        %v783 = vpack.c.b16 %v773, %v772
        %v784 = vpack.c.b16 %v775, %v774
        %v785 = vpack.c.b16 %v777, %v776
        %794 = vmatprep.subr.bf16.mxu0 0
        %795 = vmatpush1.bf16.msra.mxu0 %v785
        %796 = vmatprep.subr.bf16.mxu0 0
        %797 = vmatpush1.bf16.msra.mxu0 %v784
        %798 = vmatprep.subr.bf16.mxu0 0
        %799 = vmatpush1.bf16.msra.mxu0 %v783
        %800 = vmatprep.subr.bf16.mxu0 0
        %801 = vmatpush1.bf16.msra.mxu0 %v782
        %802 = vmatprep.subr.bf16.mxu0 0
        %803 = vmatpush1.bf16.msra.mxu0 %v781
        %804 = vmatprep.subr.bf16.mxu0 0
        %805 = vmatpush1.bf16.msra.mxu0 %v780
        %806 = vmatprep.subr.bf16.mxu0 0
        %807 = vmatpush1.bf16.msra.mxu0 %v779
        %808 = vmatprep.subr.bf16.mxu0 0
        %809 = vmatpush1.bf16.msra.mxu0 %v778
        %810 = vmatprep.subr.bf16.mxu0 0
        %811 = vmatpush2.bf16.msra.mxu0 0
        %812 = vmatprep.subr.bf16.mxu0 0
        %813 = vmatpush2.bf16.msra.mxu0 0
        %814 = vmatprep.subr.bf16.mxu0 0
        %815 = vmatpush2.bf16.msra.mxu0 0
        %816 = vmatprep.subr.bf16.mxu0 0
        %817 = vmatpush2.bf16.msra.mxu0 0
        %818 = vmatprep.subr.bf16.mxu0 0
        %819 = vmatpush2.bf16.msra.mxu0 0
        %820 = vmatprep.subr.bf16.mxu0 0
        %821 = vmatpush2.bf16.msra.mxu0 0
        %822 = vmatprep.subr.bf16.mxu0 0
        %823 = vmatpush2.bf16.msra.mxu0 0
        %824 = vmatprep.subr.bf16.mxu0 0
        %825 = vmatpush2.bf16.msra.mxu0 0
        %826 = vmatprep.mubr.bf16.mxu0 0
        %827 = vmatmul.mubr.bf16.gmra.mxu0 %v744
        %v828 = vpop.f32.mrf.mxu0
        %v829 = vadd.f32 %v738, %v828
        %v830 = vpop.f32.mrf.mxu0
        %v831 = vpop.f32.mrf.mxu0
        %v832 = vadd.f32 %v738, %v831
        %v833 = vpop.f32.mrf.mxu0
        %834 = vdwg.mxu0
        %v835 = vmul.f32 %v593, 0.17677669
        %v836 = vmul.f32 %v596, 0.17677669
        %v837 = vpack.c.bf16 %v836, %v835
        %v838 = vpack.c.bf16 %v714, %v711
        %v840 = vunpack.c.l.b16 %v838
        %v841 = vunpack.c.h.b16 %v838
        %v842 = vpack.c.b16 %v840, %v840
        %v843 = vpack.c.b16 %v841, %v841
        %846 = vst [vmem:[#allocation2] sm:$0xf] %v842
        %847 = vst [vmem:[#allocation2 + $0x4] sm:$0xf] %v843
        %v848 = vpack.c.bf16 %v832, %v829
        %v850 = vunpack.c.l.b16 %v848
        %v851 = vunpack.c.h.b16 %v848
        %v852 = vpack.c.b16 %v850, %v850
        %v853 = vpack.c.b16 %v851, %v851
        %856 = vst [vmem:[#allocation3] sm:$0xf] %v852
        %857 = vst [vmem:[#allocation3 + $0x4] sm:$0xf] %v853
        %v858 = vld [vmem:[#allocation2] sm:$0xf]
        %v859 = vld [vmem:[#allocation2 + $0x4] sm:$0xf]
        %v860 = vld [vmem:[#allocation3] sm:$0xf]
        %v861 = vld [vmem:[#allocation3 + $0x4] sm:$0xf]
        %v864 = vunpack.c.l.b16 %v858
        %v865 = vunpack.c.l.b16 %v859
        %v866 = vpack.c.b16 %v865, %v864
        %868 = vmatprep.subr.bf16.mxu0 0
        %869 = vmatpush1.bf16.xpose.msra.mxu0 0
        %870 = vmatprep.subr.bf16.mxu0 0
        %871 = vmatpush1.bf16.xpose.msra.mxu0 0
        %872 = vmatprep.subr.bf16.mxu0 0
        %873 = vmatpush1.bf16.xpose.msra.mxu0 0
        %874 = vmatprep.subr.bf16.mxu0 0
        %875 = vmatpush1.bf16.xpose.msra.mxu0 0
        %876 = vmatprep.subr.bf16.mxu0 0
        %877 = vmatpush1.bf16.xpose.msra.mxu0 0
        %878 = vmatprep.subr.bf16.mxu0 0
        %879 = vmatpush1.bf16.xpose.msra.mxu0 0
        %880 = vmatprep.subr.bf16.mxu0 0
        %881 = vmatpush1.bf16.xpose.msra.mxu0 0
        %882 = vmatprep.subr.bf16.mxu0 0
        %883 = vmatpush1.bf16.xpose.msra.mxu0 %v866
        %884 = vmatprep.subr.bf16.mxu0 0
        %885 = vmatpush2.bf16.xpose.msra.mxu0 0
        %886 = vmatprep.subr.bf16.mxu0 0
        %887 = vmatpush2.bf16.xpose.msra.mxu0 0
        %888 = vmatprep.subr.bf16.mxu0 0
        %889 = vmatpush2.bf16.xpose.msra.mxu0 0
        %890 = vmatprep.subr.bf16.mxu0 0
        %891 = vmatpush2.bf16.xpose.msra.mxu0 0
        %892 = vmatprep.subr.bf16.mxu0 0
        %893 = vmatpush2.bf16.xpose.msra.mxu0 0
        %894 = vmatprep.subr.bf16.mxu0 0
        %895 = vmatpush2.bf16.xpose.msra.mxu0 0
        %896 = vmatprep.subr.bf16.mxu0 0
        %897 = vmatpush2.bf16.xpose.msra.mxu0 0
        %898 = vmatprep.subr.bf16.mxu0 0
        %899 = vmatpush2.bf16.xpose.msra.mxu0 0
        %900 = vmatprep.mubr.bf16.mxu0 0
        %901 = vmatmul.mubr.bf16.gmra.mxu0 %v837
        %v902 = vpop.f32.mrf.mxu0
        %v903 = vadd.f32 0.0, %v902
        %v904 = vpop.f32.mrf.mxu0
        %v905 = vpop.f32.mrf.mxu0
        %v906 = vadd.f32 0.0, %v905
        %v907 = vpop.f32.mrf.mxu0
        %908 = vdwg.mxu0
        %v909 = vlaneseq
        %v910 = vand.u32 %v909, 127
        %vm911 = vcmp.lt.s32.totalorder %v910, 8
        %v912 = vsel %vm911, %v903, -1e+30
        %v913 = vsel %vm911, %v906, -1e+30
        %vm914 = vcmask 130048
        %v915 = vsel %vm914, %v912, -inf
        %916 = vmax.xlane.f32.xlu0 %v915
        %v917 = vpop.xlane.xlu0 %916
        %v918 = vsel %vm914, %v913, -inf
        %919 = vmax.xlane.f32.xlu0 %v918
        %v920 = vpop.xlane.xlu0 %919
        %v921 = vsub.f32 -inf, %v917
        %v922 = vsub.f32 -inf, %v920
        %v923 = vmul.f32 %v921, 1.442695
        %v924 = vpow.pop %v923
        %v925 = vmul.f32 %v922, 1.442695
        %v926 = vpow.pop %v925
        %v927 = vsub.f32 %v912, %v917
        %v928 = vsub.f32 %v913, %v920
        %v929 = vmul.f32 %v927, 1.442695
        %v930 = vpow.pop %v929
        %v931 = vmul.f32 %v928, 1.442695
        %v932 = vpow.pop %v931
        %v933 = vmul.f32 %v924, 0.0
        %v934 = vmul.f32 %v926, 0.0
        %v935 = vsel %vm914, %v930, 0.0
        %936 = vadd.xlane.f32.xlu0 %v935
        %v937 = vpop.xlane.xlu0 %936
        %v938 = vsel %vm914, %v932, 0.0
        %939 = vadd.xlane.f32.xlu0 %v938
        %v940 = vpop.xlane.xlu0 %939
        %v941 = vadd.f32 %v933, %v937
        %v942 = vadd.f32 %v934, %v940
        %v943 = vpack.c.bf16 %v932, %v930
        %v946 = vunpack.c.l.b16 %v860
        %v947 = vunpack.c.l.b16 %v861
        %v948 = vpack.c.b16 %v947, %v946
        %v951 = vsel %vm914, %v943, 0
        %953 = vmatprep.subr.bf16.mxu0 0
        %954 = vmatpush1.bf16.msra.mxu0 0
        %955 = vmatprep.subr.bf16.mxu0 0
        %956 = vmatpush1.bf16.msra.mxu0 0
        %957 = vmatprep.subr.bf16.mxu0 0
        %958 = vmatpush1.bf16.msra.mxu0 0
        %959 = vmatprep.subr.bf16.mxu0 0
        %960 = vmatpush1.bf16.msra.mxu0 0
        %961 = vmatprep.subr.bf16.mxu0 0
        %962 = vmatpush1.bf16.msra.mxu0 0
        %963 = vmatprep.subr.bf16.mxu0 0
        %964 = vmatpush1.bf16.msra.mxu0 0
        %965 = vmatprep.subr.bf16.mxu0 0
        %966 = vmatpush1.bf16.msra.mxu0 0
        %967 = vmatprep.subr.bf16.mxu0 0
        %968 = vmatpush1.bf16.msra.mxu0 %v948
        %969 = vmatprep.subr.bf16.mxu0 0
        %970 = vmatpush2.bf16.msra.mxu0 0
        %971 = vmatprep.subr.bf16.mxu0 0
        %972 = vmatpush2.bf16.msra.mxu0 0
        %973 = vmatprep.subr.bf16.mxu0 0
        %974 = vmatpush2.bf16.msra.mxu0 0
        %975 = vmatprep.subr.bf16.mxu0 0
        %976 = vmatpush2.bf16.msra.mxu0 0
        %977 = vmatprep.subr.bf16.mxu0 0
        %978 = vmatpush2.bf16.msra.mxu0 0
        %979 = vmatprep.subr.bf16.mxu0 0
        %980 = vmatpush2.bf16.msra.mxu0 0
        %981 = vmatprep.subr.bf16.mxu0 0
        %982 = vmatpush2.bf16.msra.mxu0 0
        %983 = vmatprep.subr.bf16.mxu0 0
        %984 = vmatpush2.bf16.msra.mxu0 0
        %985 = vmatprep.mubr.bf16.mxu0 0
        %986 = vmatmul.mubr.bf16.gmra.mxu0 %v951
        %v987 = vpop.f32.mrf.mxu0
        %v988 = vadd.f32 0.0, %v987
        %v989 = vpop.f32.mrf.mxu0
        %v990 = vpop.f32.mrf.mxu0
        %v991 = vadd.f32 0.0, %v990
        %v992 = vpop.f32.mrf.mxu0
        %993 = vdwg.mxu0
        %v994 = vadd.f32 %v933, %v988
        %v995 = vadd.f32 %v934, %v991
        %v996 = vrcp.pop %v941
        %v997 = vrcp.pop %v942
        %v998 = vmul.f32 %v994, %v996
        %v999 = vmul.f32 %v995, %v997
        %1000 = vst [vmem:[%s473] sm:$0xff] %v998
        %1001 = vst [vmem:[%s473 + $0x8] sm:$0xff] %v999
        %s1002 = sand.u32 %s245, 1
        %s1003 = scalar_lea.sflag [#allocation8], %s1002
        %s1004 = sand.u32 %s245, 1
        %s1005 = smul.addr %s1004, 16
        %s1006 = scalar_lea.vmem [#allocation17], %s1005
        // Predicated region
        $region81: #{tpu_custom_call.1} parent=55 // pred_check
          %p1007 = pneg %p255
        $region82: #{tpu_custom_call.1} parent=55 // pred_check_branch
          %1009 = sbr.rel (%p1007) target = $region84
        $region83: #{tpu_custom_call.1} parent=55 // pred_region
          %s1011 = ssub.s32 256, 256
          %1012 = vsyncadd %s1003, %s1011
          %s1013 = smul.addr %s33, 2
          %s1014 = smul.addr %s1013, 128
          %s1015 = scalar_lea.hbm %s10, %s1014
          %s1016 = sshll.u32 %s1006, 4
          %s1017 = int_to_ptr.vmem [resolvable:$true] %s1016
          %1022 = dma.vmem_to_hbm [thread:$0]  %s1017, 256, %s1015, %s1003, 128, 128, 8
        $region84: #{tpu_custom_call.1} parent=55 // pred_fallthru
          _
      $region56: #{tpu_custom_call.1} parent=5 // pred_fallthru
        _
      %p1023 = scmp.le.s32.totalorder 2, %s28
      // Predicated region
      $region85: #{tpu_custom_call.1} parent=5 // pred_check
        %p1024 = pneg %p1023
      $region86: #{tpu_custom_call.1} parent=5 // pred_check_branch
        %1026 = sbr.rel (%p1024) target = $region88
      $region87: #{tpu_custom_call.1} parent=5 // pred_region
        %s1027 = ssub.s32 %s28, 2
        // Predicated region
        $region89: #{tpu_custom_call.1} parent=87 // pred_check
          %p1028 = pneg %p261
        $region90: #{tpu_custom_call.1} parent=87 // pred_check_branch
          %1030 = sbr.rel (%p1028) target = $region92
        $region91: #{tpu_custom_call.1} parent=87 // pred_region
          %s1031 = sand.u32 %s246, 1
          %s1032 = scalar_lea.sflag [#allocation8], %s1031
          %s1033 = sand.u32 %s246, 1
          %s1034 = smul.addr %s1033, 16
          %s1035 = scalar_lea.vmem [#allocation17], %s1034
          %1036 = dma.done %s1032, 256
        $region92: #{tpu_custom_call.1} parent=87 // pred_fallthru
          _
      $region88: #{tpu_custom_call.1} parent=5 // pred_fallthru
        _
    $region6: #{tpu_custom_call.1} parent=1 // loop_footer
      %s32 = sadd.s32 1, %s28
    $region7: #{tpu_custom_call.1} parent=1 // loop_footer_branch
      %27 = sbr.rel target = $region3
    $region8: #{tpu_custom_call.1} parent=1 // loop_exit
      _
    %1037 = vsyncpa [#allocation7], 1
    %s1038 = scalar_lea.sflag [#allocation7], 1
    %1039 = vsyncpa %s1038, 1
    %1040 = vsyncpa [#allocation10], 1
    %s1041 = scalar_lea.sflag [#allocation10], 1
    %1042 = vsyncpa %s1041, 1
    %1043 = vsyncpa [#allocation13], 1
    %1044 = vsyncpa [#allocation16], 1
    %1045 = vsyncpa [#allocation8], 1
    %s1046 = scalar_lea.sflag [#allocation8], 1
    %1047 = vsyncpa %s1046, 1

</llo_original>
